<compile_context>
chip_gen: v7x
topology: tpu7x:2x2x1
jax: 0.10.0
libtpu: 0.0.40
codegen_flags: <defaults>
</compile_context>

<pallas_src>
import functools

import jax
import jax.numpy as jnp
from jax.experimental import pallas as pl
from jax.experimental.pallas import tpu as pltpu

_LANE = 128
_SUBLANE = 8
_VMEM = pl.BlockSpec(memory_space=pltpu.MemorySpace.VMEM)


def _round_up(x, m):
    return ((x + m - 1) // m) * m


def _pad2(x, rows, cols):
    return jnp.pad(x, ((0, rows - x.shape[0]), (0, cols - x.shape[1])))


def _vmem_capacity_bytes():
    """Physical VMEM per core; conservative v7x fallback if the query fails."""
    try:
        return int(pltpu.get_tpu_info().vmem_capacity_bytes)
    except Exception:
        return 64 << 20


# ----------------------------------------------------------------------------
# Fused Pallas kernel: conv1 -> conv2 -> conv3 -> mean-pool -> head
# Intermediates h1/h2/h3 stay in VMEM for the whole kernel.
# ----------------------------------------------------------------------------
def fixed_gin_kernel(a_ref, x_ref, p_ref, inv_ref,
                     w11_ref, b11_ref, w12_ref, b12_ref,
                     w21_ref, b21_ref, w22_ref, b22_ref,
                     w31_ref, b31_ref, w32_ref, b32_ref,
                     wl1a_ref, wl1b_ref, wl1c_ref, bl1_ref, wl2_ref, bl2_ref,
                     logits_ref, logp_ref, *, output_dim):
    a = a_ref[...]                              # bf16 [Np, Np], A[dst, src] = 1
    x_bf = x_ref[...]                           # bf16 [Np, Fp] (already bf16)

    def gin_layer(h_bf, h_f32, w1_ref, b1_ref, w2_ref, b2_ref):
        # z = (1 + eps) * x + sum_{neighbors} x_j, eps = 0
        agg = jnp.dot(a, h_bf, preferred_element_type=jnp.float32)
        z = (h_f32 + agg).astype(jnp.bfloat16)
        # MLP: Linear (BatchNorm folded in) -> ReLU -> Linear -> ReLU
        y = jnp.dot(z, w1_ref[...], preferred_element_type=jnp.float32) + b1_ref[...]
        y = jnp.maximum(y, 0.0).astype(jnp.bfloat16)
        y = jnp.dot(y, w2_ref[...], preferred_element_type=jnp.float32) + b2_ref[...]
        y = jnp.maximum(y, 0.0)                 # f32 ReLU output
        # bf16 copy made once; reused by the next layer's A@h and by pooling.
        return y.astype(jnp.bfloat16), y

    h1_bf, h1 = gin_layer(x_bf, x_bf.astype(jnp.float32),
                          w11_ref, b11_ref, w12_ref, b12_ref)
    h2_bf, _ = gin_layer(h1_bf, h1, w21_ref, b21_ref, w22_ref, b22_ref)
    h3_bf, _ = gin_layer(h2_bf, _, w31_ref, b31_ref, w32_ref, b32_ref)

    # global mean pool: bf16 one-hot matmul (exact) + 1/|graph| VPU scaling
    p = p_ref[...]                              # bf16 0/1 [Gp, Np]
    inv = inv_ref[...]                          # f32 [Gp, 1]
    m1 = (jnp.dot(p, h1_bf, preferred_element_type=jnp.float32) * inv).astype(jnp.bfloat16)
    m2 = (jnp.dot(p, h2_bf, preferred_element_type=jnp.float32) * inv).astype(jnp.bfloat16)
    m3 = (jnp.dot(p, h3_bf, preferred_element_type=jnp.float32) * inv).astype(jnp.bfloat16)

    # lin1 (split K, no concat / dead-K) -> ReLU -> Dropout(eval=identity) -> lin2
    acc = jnp.dot(m1, wl1a_ref[...], preferred_element_type=jnp.float32)
    acc = acc + jnp.dot(m2, wl1b_ref[...], preferred_element_type=jnp.float32)
    acc = acc + jnp.dot(m3, wl1c_ref[...], preferred_element_type=jnp.float32)
    h = jnp.maximum(acc + bl1_ref[...], 0.0).astype(jnp.bfloat16)
    logits = jnp.dot(h, wl2_ref[...], preferred_element_type=jnp.float32) + bl2_ref[...]
    logits_ref[...] = logits

    # log_softmax over the real (unpadded) classes only.
    cols = jax.lax.broadcasted_iota(jnp.int32, logits.shape, 1)
    masked = jnp.where(cols < output_dim, logits, jnp.float32(-1e30))
    mx = jnp.max(masked, axis=-1, keepdims=True)
    s = masked - mx
    lse = jnp.log(jnp.sum(jnp.exp(s), axis=-1, keepdims=True))
    logp_ref[...] = s - lse


# ----------------------------------------------------------------------------
# Host-side parameter folding / padding / casting
# ----------------------------------------------------------------------------
def _fold_bn(w1, b1, gamma, beta, mean, var, eps=1e-5):
    scale = gamma * jax.lax.rsqrt(var + eps)     # [1, H]
    return w1 * scale, (b1 - mean) * scale + beta


def _prep_conv(p, in_pad, h_pad):
    w1, b1 = _fold_bn(p["w1"], p["b1"], p["gamma"], p["beta"], p["mean"], p["var"])
    return (_pad2(w1, in_pad, h_pad).astype(jnp.bfloat16),
            _pad2(b1, 1, h_pad),
            _pad2(p["w2"], h_pad, h_pad).astype(jnp.bfloat16),
            _pad2(p["b2"], 1, h_pad))


def _prep_head(p, dim_h, h_pad, out_dim, out_pad, l1_pad):
    H = dim_h
    L1 = 3 * H
    # Split w_lin1 into three [H, 3H] row-blocks, each padded to [Hp, L1p],
    # so the head is three dense-K bf16 matmuls (no concat, no dead-K rows
    # scattered at i*Hp offsets).
    blocks = []
    for i in range(3):
        blk = jnp.zeros((h_pad, l1_pad), jnp.float32)
        blk = blk.at[:H, :L1].set(p["w_lin1"][i * H:(i + 1) * H, :])
        blocks.append(blk.astype(jnp.bfloat16))
    bl1 = _pad2(p["b_lin1"], 1, l1_pad)
    wl2 = jnp.zeros((l1_pad, out_pad), jnp.float32).at[:L1, :out_dim].set(
        p["w_lin2"]).astype(jnp.bfloat16)
    bl2 = _pad2(p["b_lin2"], 1, out_pad)
    return (*blocks, bl1, wl2, bl2)


@functools.partial(jax.jit, static_argnames=("dim_h", "output_dim"))
def fixed_gin_forward(X, A, onehot, params, *, dim_h, output_dim):
    N, F = X.shape
    G = onehot.shape[0]
    Np = _round_up(N, _LANE)
    Fp = _round_up(F, _LANE)
    Hp = _round_up(dim_h, _LANE)
    L1p = _round_up(3 * dim_h, _LANE)
    Op = _round_up(output_dim, _LANE)
    Gp = _round_up(G, _SUBLANE)      # sublane-dense pooled rows / output rows

    # Deliberate: features/adjacency/one-hot go to bf16 once here (A and the
    # one-hot are 0/1 -> exact; X rounding is covered by the test tolerance).
    Xp = _pad2(X, Np, Fp).astype(jnp.bfloat16)
    Ap = _pad2(A, Np, Np).astype(jnp.bfloat16)
    Pp = _pad2(onehot, Gp, Np).astype(jnp.bfloat16)   # padded rows/cols are 0
    counts = jnp.sum(onehot, axis=1, keepdims=True)
    inv = jnp.where(counts > 0, 1.0 / jnp.maximum(counts, 1.0), 0.0)
    invp = _pad2(inv, Gp, 1)                          # f32 [Gp, 1]

    c1 = _prep_conv(params["conv1"], Fp, Hp)
    c2 = _prep_conv(params["conv2"], Hp, Hp)
    c3 = _prep_conv(params["conv3"], Hp, Hp)
    hd = _prep_head(params["head"], dim_h, Hp, output_dim, Op, L1p)

    # --- explicit VMEM budget for the fully-fused, VMEM-resident path -------
    resident = (
        2 * Np * Np + 2 * Np * Fp + 2 * Gp * Np + 4 * Gp        # A, X, P, inv
        + 2 * (Fp * Hp + 5 * Hp * Hp + 3 * Hp * L1p + L1p * Op)  # bf16 weights
        + 4 * (6 * Hp + L1p + Op)                                # f32 biases
        + 3 * 6 * Np * Hp                                        # h1..h3 f32+bf16
        + 2 * 4 * Gp * Op                                        # two f32 outputs
    )
    budget = (_vmem_capacity_bytes() * 3) // 4       # ~48 MiB on v7x, ~96 MiB else
    if resident > budget:
        # TODO(synk): row-tiled A streaming (grid over (row, k), Buffered(2-3),
        # 'parallel' row axis for v7x megacore) and CSR/segment-sum sparse
        # aggregation for graphs that don't fit the resident VMEM budget.
        raise NotImplementedError(
            "graph too large for the fused VMEM-resident path "
            f"({resident} B > budget {budget} B)")
    vmem_limit = int(min(max(2 * resident + (4 << 20), 32 << 20), budget))

    # Advisory cost estimate for XLA's scheduler around the custom call.
    flops = 2 * (Np * Np * Fp + Np * Fp * Hp + Np * Hp * Hp)       # conv1
    flops += 2 * 2 * (Np * Np * Hp + 2 * Np * Hp * Hp)             # conv2, conv3
    flops += 3 * 2 * Gp * Np * Hp                                  # pooling
    flops += 3 * 2 * Gp * Hp * L1p + 2 * Gp * L1p * Op             # head
    cost = pl.CostEstimate(flops=int(flops), transcendentals=int(Gp * Op),
                           bytes_accessed=int(resident))

    args = (Ap, Xp, Pp, invp, *c1, *c2, *c3, *hd)
    logits_p, logp_p = pl.pallas_call(
        functools.partial(fixed_gin_kernel, output_dim=output_dim),
        out_shape=(jax.ShapeDtypeStruct((Gp, Op), jnp.float32),
                   jax.ShapeDtypeStruct((Gp, Op), jnp.float32)),
        in_specs=[_VMEM] * len(args),
        out_specs=(_VMEM, _VMEM),
        compiler_params=pltpu.CompilerParams(vmem_limit_bytes=vmem_limit),
        cost_estimate=cost,
    )(*args)
    return logits_p[:G, :output_dim], logp_p[:G, :output_dim]


# ----------------------------------------------------------------------------
# Pure-JAX f32 reference (same semantics, unfused, unpadded)
# ----------------------------------------------------------------------------
def reference_forward(X, A, P, params):
    def conv(h, p):
        z = h + A @ h
        y = z @ p["w1"] + p["b1"]
        inv = jax.lax.rsqrt(p["var"] + 1e-5)
        y = (y - p["mean"]) * inv * p["gamma"] + p["beta"]
        y = jnp.maximum(y, 0.0)
        y = y @ p["w2"] + p["b2"]
        return jnp.maximum(y, 0.0)

    h1 = conv(X, params["conv1"])
    h2 = conv(h1, params["conv2"])
    h3 = conv(h2, params["conv3"])
    m = jnp.concatenate([P @ h1, P @ h2, P @ h3], axis=1)
    hd = params["head"]
    h = jnp.maximum(m @ hd["w_lin1"] + hd["b_lin1"], 0.0)
    logits = h @ hd["w_lin2"] + hd["b_lin2"]
    return logits, jax.nn.log_softmax(logits, axis=1)


# ----------------------------------------------------------------------------
# Deterministic parameter init (synthetic; mirrors the module's shapes)
# ----------------------------------------------------------------------------
def _linear(key, fan_in, fan_out):
    k1, k2 = jax.random.split(key)
    w = jax.random.normal(k1, (fan_in, fan_out), jnp.float32) / jnp.sqrt(
        jnp.float32(fan_in))
    b = 0.01 * jax.random.normal(k2, (1, fan_out), jnp.float32)
    return w, b


def _conv_params(key, fan_in, dim_h):
    k1, k2 = jax.random.split(key)
    w1, b1 = _linear(k1, fan_in, dim_h)
    w2, b2 = _linear(k2, dim_h, dim_h)
    return dict(
        w1=w1, b1=b1, w2=w2, b2=b2,
        gamma=jnp.ones((1, dim_h), jnp.float32),
        beta=jnp.zeros((1, dim_h), jnp.float32),
        mean=jnp.zeros((1, dim_h), jnp.float32),
        var=jnp.ones((1, dim_h), jnp.float32),
    )


def make_params(key, num_node_features, dim_h, output_dim):
    k1, k2, k3, k4, k5 = jax.random.split(key, 5)
    w_lin1, b_lin1 = _linear(k4, dim_h * 3, dim_h * 3)
    w_lin2, b_lin2 = _linear(k5, dim_h * 3, output_dim)
    return dict(
        conv1=_conv_params(k1, num_node_features, dim_h),
        conv2=_conv_params(k2, dim_h, dim_h),
        conv3=_conv_params(k3, dim_h, dim_h),
        head=dict(w_lin1=w_lin1, b_lin1=b_lin1, w_lin2=w_lin2, b_lin2=b_lin2),
    )


# ----------------------------------------------------------------------------
# Main
# ----------------------------------------------------------------------------
if __name__ == "__main__":
    # Small, module-consistent shapes.
    num_node_features = 16   # ds_num_node_features
    dim_h = 32
    output_dim = 8
    num_graphs = 4
    nodes_per_graph = 8
    N = num_graphs * nodes_per_graph  # 32 nodes total

    key = jax.random.PRNGKey(0)
    k_x, k_params = jax.random.split(key)

    # Node features x: [N, num_node_features]
    X = jax.random.normal(k_x, (N, num_node_features), jnp.float32)

    # edge_index: undirected ring within each graph (row 0 = src, row 1 = dst)
    src, dst = [], []
    for g in range(num_graphs):
        base = g * nodes_per_graph
        for i in range(nodes_per_graph):
            j = (i + 1) % nodes_per_graph
            src += [base + i, base + j]
            dst += [base + j, base + i]
    edge_index = jnp.array([src, dst], dtype=jnp.int32)

    # batch: graph id per node
    batch = jnp.repeat(jnp.arange(num_graphs, dtype=jnp.int32), nodes_per_graph)

    # Dense adjacency A[dst, src] = 1  -> neighbor sum = A @ X
    A = jnp.zeros((N, N), jnp.float32).at[edge_index[1], edge_index[0]].add(1.0)

    # One-hot graph membership [G, N]; mean-pool matrix P = onehot / counts
    onehot = (batch[None, :] == jnp.arange(num_graphs)[:, None]).astype(jnp.float32)
    counts = jnp.sum(onehot, axis=1, keepdims=True)
    P = onehot / counts

    params = make_params(k_params, num_node_features, dim_h, output_dim)

    logits, log_probs = fixed_gin_forward(
        X, A, onehot, params, dim_h=dim_h, output_dim=output_dim)
    jax.block_until_ready((logits, log_probs))

    assert logits.shape == (num_graphs, output_dim)
    assert log_probs.shape == (num_graphs, output_dim)
    # log_softmax sanity: rows of exp(log_probs) sum to ~1
    assert jnp.allclose(jnp.sum(jnp.exp(log_probs), axis=1), 1.0, atol=1e-4)

    # Compare against a pure-JAX f32 reference (loose tolerance: bf16 matmuls).
    ref_logits, ref_logp = reference_forward(X, A, P, params)
    assert jnp.allclose(logits, ref_logits, atol=0.15, rtol=0.15), float(
        jnp.max(jnp.abs(logits - ref_logits)))
    assert jnp.allclose(log_probs, ref_logp, atol=0.15, rtol=0.15), float(
        jnp.max(jnp.abs(log_probs - ref_logp)))

    print("KERNEL_OK")
</pallas_src>

<mosaic_0001>
module attributes {stable_mosaic.version = 11 : i64} {
  func.func @fixed_gin_kernel(%arg0: memref<128x128xbf16, #tpu.memory_space<vmem>>, %arg1: memref<128x128xbf16, #tpu.memory_space<vmem>>, %arg2: memref<8x128xbf16, #tpu.memory_space<vmem>>, %arg3: memref<8x1xf32, #tpu.memory_space<vmem>>, %arg4: memref<128x128xbf16, #tpu.memory_space<vmem>>, %arg5: memref<1x128xf32, #tpu.memory_space<vmem>>, %arg6: memref<128x128xbf16, #tpu.memory_space<vmem>>, %arg7: memref<1x128xf32, #tpu.memory_space<vmem>>, %arg8: memref<128x128xbf16, #tpu.memory_space<vmem>>, %arg9: memref<1x128xf32, #tpu.memory_space<vmem>>, %arg10: memref<128x128xbf16, #tpu.memory_space<vmem>>, %arg11: memref<1x128xf32, #tpu.memory_space<vmem>>, %arg12: memref<128x128xbf16, #tpu.memory_space<vmem>>, %arg13: memref<1x128xf32, #tpu.memory_space<vmem>>, %arg14: memref<128x128xbf16, #tpu.memory_space<vmem>>, %arg15: memref<1x128xf32, #tpu.memory_space<vmem>>, %arg16: memref<128x128xbf16, #tpu.memory_space<vmem>>, %arg17: memref<128x128xbf16, #tpu.memory_space<vmem>>, %arg18: memref<128x128xbf16, #tpu.memory_space<vmem>>, %arg19: memref<1x128xf32, #tpu.memory_space<vmem>>, %arg20: memref<128x128xbf16, #tpu.memory_space<vmem>>, %arg21: memref<1x128xf32, #tpu.memory_space<vmem>>, %arg22: memref<8x128xf32, #tpu.memory_space<vmem>>, %arg23: memref<8x128xf32, #tpu.memory_space<vmem>>) attributes {dimension_semantics = [], scalar_prefetch = 0 : i64, scratch_operands = 0 : i64, tpu.core_type = #tpu.core_type<tc>} {
    %c0 = arith.constant 0 : index
    %c0_0 = arith.constant 0 : index
    %0 = vector.load %arg0[%c0, %c0_0] : memref<128x128xbf16, #tpu.memory_space<vmem>>, vector<128x128xbf16>
    %c0_1 = arith.constant 0 : index
    %c0_2 = arith.constant 0 : index
    %1 = vector.load %arg1[%c0_1, %c0_2] : memref<128x128xbf16, #tpu.memory_space<vmem>>, vector<128x128xbf16>
    %2 = arith.extf %1 : vector<128x128xbf16> to vector<128x128xf32>
    %cst = arith.constant dense<0.000000e+00> : vector<128x128xf32>
    %3 = tpu.matmul %0, %1, %cst {dimension_numbers = #tpu.dot_dimension_numbers<[1], [0], [0], [1], [0, 0, 1, 1], [], []>} : vector<128x128xbf16>, vector<128x128xbf16>, vector<128x128xf32> -> vector<128x128xf32>
    %4 = arith.addf %2, %3 : vector<128x128xf32>
    %5 = arith.truncf %4 : vector<128x128xf32> to vector<128x128xbf16>
    %c0_3 = arith.constant 0 : index
    %c0_4 = arith.constant 0 : index
    %6 = vector.load %arg4[%c0_3, %c0_4] : memref<128x128xbf16, #tpu.memory_space<vmem>>, vector<128x128xbf16>
    %cst_5 = arith.constant dense<0.000000e+00> : vector<128x128xf32>
    %7 = tpu.matmul %5, %6, %cst_5 {dimension_numbers = #tpu.dot_dimension_numbers<[1], [0], [0], [1], [0, 0, 1, 1], [], []>} : vector<128x128xbf16>, vector<128x128xbf16>, vector<128x128xf32> -> vector<128x128xf32>
    %c0_6 = arith.constant 0 : index
    %c0_7 = arith.constant 0 : index
    %8 = vector.load %arg5[%c0_6, %c0_7] : memref<1x128xf32, #tpu.memory_space<vmem>>, vector<1x128xf32>
    %9 = vector.broadcast %8 : vector<1x128xf32> to vector<128x128xf32>
    %10 = arith.addf %7, %9 : vector<128x128xf32>
    %cst_8 = arith.constant 0.000000e+00 : f32
    %11 = vector.broadcast %cst_8 : f32 to vector<128x128xf32>
    %12 = arith.maximumf %10, %11 : vector<128x128xf32>
    %13 = arith.truncf %12 : vector<128x128xf32> to vector<128x128xbf16>
    %c0_9 = arith.constant 0 : index
    %c0_10 = arith.constant 0 : index
    %14 = vector.load %arg6[%c0_9, %c0_10] : memref<128x128xbf16, #tpu.memory_space<vmem>>, vector<128x128xbf16>
    %cst_11 = arith.constant dense<0.000000e+00> : vector<128x128xf32>
    %15 = tpu.matmul %13, %14, %cst_11 {dimension_numbers = #tpu.dot_dimension_numbers<[1], [0], [0], [1], [0, 0, 1, 1], [], []>} : vector<128x128xbf16>, vector<128x128xbf16>, vector<128x128xf32> -> vector<128x128xf32>
    %c0_12 = arith.constant 0 : index
    %c0_13 = arith.constant 0 : index
    %16 = vector.load %arg7[%c0_12, %c0_13] : memref<1x128xf32, #tpu.memory_space<vmem>>, vector<1x128xf32>
    %17 = vector.broadcast %16 : vector<1x128xf32> to vector<128x128xf32>
    %18 = arith.addf %15, %17 : vector<128x128xf32>
    %cst_14 = arith.constant 0.000000e+00 : f32
    %19 = vector.broadcast %cst_14 : f32 to vector<128x128xf32>
    %20 = arith.maximumf %18, %19 : vector<128x128xf32>
    %21 = arith.truncf %20 : vector<128x128xf32> to vector<128x128xbf16>
    %cst_15 = arith.constant dense<0.000000e+00> : vector<128x128xf32>
    %22 = tpu.matmul %0, %21, %cst_15 {dimension_numbers = #tpu.dot_dimension_numbers<[1], [0], [0], [1], [0, 0, 1, 1], [], []>} : vector<128x128xbf16>, vector<128x128xbf16>, vector<128x128xf32> -> vector<128x128xf32>
    %23 = arith.addf %20, %22 : vector<128x128xf32>
    %24 = arith.truncf %23 : vector<128x128xf32> to vector<128x128xbf16>
    %c0_16 = arith.constant 0 : index
    %c0_17 = arith.constant 0 : index
    %25 = vector.load %arg8[%c0_16, %c0_17] : memref<128x128xbf16, #tpu.memory_space<vmem>>, vector<128x128xbf16>
    %cst_18 = arith.constant dense<0.000000e+00> : vector<128x128xf32>
    %26 = tpu.matmul %24, %25, %cst_18 {dimension_numbers = #tpu.dot_dimension_numbers<[1], [0], [0], [1], [0, 0, 1, 1], [], []>} : vector<128x128xbf16>, vector<128x128xbf16>, vector<128x128xf32> -> vector<128x128xf32>
    %c0_19 = arith.constant 0 : index
    %c0_20 = arith.constant 0 : index
    %27 = vector.load %arg9[%c0_19, %c0_20] : memref<1x128xf32, #tpu.memory_space<vmem>>, vector<1x128xf32>
    %28 = vector.broadcast %27 : vector<1x128xf32> to vector<128x128xf32>
    %29 = arith.addf %26, %28 : vector<128x128xf32>
    %cst_21 = arith.constant 0.000000e+00 : f32
    %30 = vector.broadcast %cst_21 : f32 to vector<128x128xf32>
    %31 = arith.maximumf %29, %30 : vector<128x128xf32>
    %32 = arith.truncf %31 : vector<128x128xf32> to vector<128x128xbf16>
    %c0_22 = arith.constant 0 : index
    %c0_23 = arith.constant 0 : index
    %33 = vector.load %arg10[%c0_22, %c0_23] : memref<128x128xbf16, #tpu.memory_space<vmem>>, vector<128x128xbf16>
    %cst_24 = arith.constant dense<0.000000e+00> : vector<128x128xf32>
    %34 = tpu.matmul %32, %33, %cst_24 {dimension_numbers = #tpu.dot_dimension_numbers<[1], [0], [0], [1], [0, 0, 1, 1], [], []>} : vector<128x128xbf16>, vector<128x128xbf16>, vector<128x128xf32> -> vector<128x128xf32>
    %c0_25 = arith.constant 0 : index
    %c0_26 = arith.constant 0 : index
    %35 = vector.load %arg11[%c0_25, %c0_26] : memref<1x128xf32, #tpu.memory_space<vmem>>, vector<1x128xf32>
    %36 = vector.broadcast %35 : vector<1x128xf32> to vector<128x128xf32>
    %37 = arith.addf %34, %36 : vector<128x128xf32>
    %cst_27 = arith.constant 0.000000e+00 : f32
    %38 = vector.broadcast %cst_27 : f32 to vector<128x128xf32>
    %39 = arith.maximumf %37, %38 : vector<128x128xf32>
    %40 = arith.truncf %39 : vector<128x128xf32> to vector<128x128xbf16>
    %cst_28 = arith.constant dense<0.000000e+00> : vector<128x128xf32>
    %41 = tpu.matmul %0, %40, %cst_28 {dimension_numbers = #tpu.dot_dimension_numbers<[1], [0], [0], [1], [0, 0, 1, 1], [], []>} : vector<128x128xbf16>, vector<128x128xbf16>, vector<128x128xf32> -> vector<128x128xf32>
    %42 = arith.addf %39, %41 : vector<128x128xf32>
    %43 = arith.truncf %42 : vector<128x128xf32> to vector<128x128xbf16>
    %c0_29 = arith.constant 0 : index
    %c0_30 = arith.constant 0 : index
    %44 = vector.load %arg12[%c0_29, %c0_30] : memref<128x128xbf16, #tpu.memory_space<vmem>>, vector<128x128xbf16>
    %cst_31 = arith.constant dense<0.000000e+00> : vector<128x128xf32>
    %45 = tpu.matmul %43, %44, %cst_31 {dimension_numbers = #tpu.dot_dimension_numbers<[1], [0], [0], [1], [0, 0, 1, 1], [], []>} : vector<128x128xbf16>, vector<128x128xbf16>, vector<128x128xf32> -> vector<128x128xf32>
    %c0_32 = arith.constant 0 : index
    %c0_33 = arith.constant 0 : index
    %46 = vector.load %arg13[%c0_32, %c0_33] : memref<1x128xf32, #tpu.memory_space<vmem>>, vector<1x128xf32>
    %47 = vector.broadcast %46 : vector<1x128xf32> to vector<128x128xf32>
    %48 = arith.addf %45, %47 : vector<128x128xf32>
    %cst_34 = arith.constant 0.000000e+00 : f32
    %49 = vector.broadcast %cst_34 : f32 to vector<128x128xf32>
    %50 = arith.maximumf %48, %49 : vector<128x128xf32>
    %51 = arith.truncf %50 : vector<128x128xf32> to vector<128x128xbf16>
    %c0_35 = arith.constant 0 : index
    %c0_36 = arith.constant 0 : index
    %52 = vector.load %arg14[%c0_35, %c0_36] : memref<128x128xbf16, #tpu.memory_space<vmem>>, vector<128x128xbf16>
    %cst_37 = arith.constant dense<0.000000e+00> : vector<128x128xf32>
    %53 = tpu.matmul %51, %52, %cst_37 {dimension_numbers = #tpu.dot_dimension_numbers<[1], [0], [0], [1], [0, 0, 1, 1], [], []>} : vector<128x128xbf16>, vector<128x128xbf16>, vector<128x128xf32> -> vector<128x128xf32>
    %c0_38 = arith.constant 0 : index
    %c0_39 = arith.constant 0 : index
    %54 = vector.load %arg15[%c0_38, %c0_39] : memref<1x128xf32, #tpu.memory_space<vmem>>, vector<1x128xf32>
    %55 = vector.broadcast %54 : vector<1x128xf32> to vector<128x128xf32>
    %56 = arith.addf %53, %55 : vector<128x128xf32>
    %cst_40 = arith.constant 0.000000e+00 : f32
    %57 = vector.broadcast %cst_40 : f32 to vector<128x128xf32>
    %58 = arith.maximumf %56, %57 : vector<128x128xf32>
    %59 = arith.truncf %58 : vector<128x128xf32> to vector<128x128xbf16>
    %c0_41 = arith.constant 0 : index
    %c0_42 = arith.constant 0 : index
    %60 = vector.load %arg2[%c0_41, %c0_42] : memref<8x128xbf16, #tpu.memory_space<vmem>>, vector<8x128xbf16>
    %c0_43 = arith.constant 0 : index
    %c0_44 = arith.constant 0 : index
    %61 = vector.load %arg3[%c0_43, %c0_44] : memref<8x1xf32, #tpu.memory_space<vmem>>, vector<8x1xf32>
    %cst_45 = arith.constant dense<0.000000e+00> : vector<8x128xf32>
    %62 = tpu.matmul %60, %21, %cst_45 {dimension_numbers = #tpu.dot_dimension_numbers<[1], [0], [0], [1], [0, 0, 1, 1], [], []>} : vector<8x128xbf16>, vector<128x128xbf16>, vector<8x128xf32> -> vector<8x128xf32>
    %63 = vector.broadcast %61 : vector<8x1xf32> to vector<8x128xf32>
    %64 = arith.mulf %62, %63 : vector<8x128xf32>
    %65 = arith.truncf %64 : vector<8x128xf32> to vector<8x128xbf16>
    %cst_46 = arith.constant dense<0.000000e+00> : vector<8x128xf32>
    %66 = tpu.matmul %60, %40, %cst_46 {dimension_numbers = #tpu.dot_dimension_numbers<[1], [0], [0], [1], [0, 0, 1, 1], [], []>} : vector<8x128xbf16>, vector<128x128xbf16>, vector<8x128xf32> -> vector<8x128xf32>
    %67 = vector.broadcast %61 : vector<8x1xf32> to vector<8x128xf32>
    %68 = arith.mulf %66, %67 : vector<8x128xf32>
    %69 = arith.truncf %68 : vector<8x128xf32> to vector<8x128xbf16>
    %cst_47 = arith.constant dense<0.000000e+00> : vector<8x128xf32>
    %70 = tpu.matmul %60, %59, %cst_47 {dimension_numbers = #tpu.dot_dimension_numbers<[1], [0], [0], [1], [0, 0, 1, 1], [], []>} : vector<8x128xbf16>, vector<128x128xbf16>, vector<8x128xf32> -> vector<8x128xf32>
    %71 = vector.broadcast %61 : vector<8x1xf32> to vector<8x128xf32>
    %72 = arith.mulf %70, %71 : vector<8x128xf32>
    %73 = arith.truncf %72 : vector<8x128xf32> to vector<8x128xbf16>
    %c0_48 = arith.constant 0 : index
    %c0_49 = arith.constant 0 : index
    %74 = vector.load %arg16[%c0_48, %c0_49] : memref<128x128xbf16, #tpu.memory_space<vmem>>, vector<128x128xbf16>
    %cst_50 = arith.constant dense<0.000000e+00> : vector<8x128xf32>
    %75 = tpu.matmul %65, %74, %cst_50 {dimension_numbers = #tpu.dot_dimension_numbers<[1], [0], [0], [1], [0, 0, 1, 1], [], []>} : vector<8x128xbf16>, vector<128x128xbf16>, vector<8x128xf32> -> vector<8x128xf32>
    %c0_51 = arith.constant 0 : index
    %c0_52 = arith.constant 0 : index
    %76 = vector.load %arg17[%c0_51, %c0_52] : memref<128x128xbf16, #tpu.memory_space<vmem>>, vector<128x128xbf16>
    %cst_53 = arith.constant dense<0.000000e+00> : vector<8x128xf32>
    %77 = tpu.matmul %69, %76, %cst_53 {dimension_numbers = #tpu.dot_dimension_numbers<[1], [0], [0], [1], [0, 0, 1, 1], [], []>} : vector<8x128xbf16>, vector<128x128xbf16>, vector<8x128xf32> -> vector<8x128xf32>
    %78 = arith.addf %75, %77 : vector<8x128xf32>
    %c0_54 = arith.constant 0 : index
    %c0_55 = arith.constant 0 : index
    %79 = vector.load %arg18[%c0_54, %c0_55] : memref<128x128xbf16, #tpu.memory_space<vmem>>, vector<128x128xbf16>
    %cst_56 = arith.constant dense<0.000000e+00> : vector<8x128xf32>
    %80 = tpu.matmul %73, %79, %cst_56 {dimension_numbers = #tpu.dot_dimension_numbers<[1], [0], [0], [1], [0, 0, 1, 1], [], []>} : vector<8x128xbf16>, vector<128x128xbf16>, vector<8x128xf32> -> vector<8x128xf32>
    %81 = arith.addf %78, %80 : vector<8x128xf32>
    %c0_57 = arith.constant 0 : index
    %c0_58 = arith.constant 0 : index
    %82 = vector.load %arg19[%c0_57, %c0_58] : memref<1x128xf32, #tpu.memory_space<vmem>>, vector<1x128xf32>
    %83 = vector.broadcast %82 : vector<1x128xf32> to vector<8x128xf32>
    %84 = arith.addf %81, %83 : vector<8x128xf32>
    %cst_59 = arith.constant 0.000000e+00 : f32
    %85 = vector.broadcast %cst_59 : f32 to vector<8x128xf32>
    %86 = arith.maximumf %84, %85 : vector<8x128xf32>
    %87 = arith.truncf %86 : vector<8x128xf32> to vector<8x128xbf16>
    %c0_60 = arith.constant 0 : index
    %c0_61 = arith.constant 0 : index
    %88 = vector.load %arg20[%c0_60, %c0_61] : memref<128x128xbf16, #tpu.memory_space<vmem>>, vector<128x128xbf16>
    %cst_62 = arith.constant dense<0.000000e+00> : vector<8x128xf32>
    %89 = tpu.matmul %87, %88, %cst_62 {dimension_numbers = #tpu.dot_dimension_numbers<[1], [0], [0], [1], [0, 0, 1, 1], [], []>} : vector<8x128xbf16>, vector<128x128xbf16>, vector<8x128xf32> -> vector<8x128xf32>
    %c0_63 = arith.constant 0 : index
    %c0_64 = arith.constant 0 : index
    %90 = vector.load %arg21[%c0_63, %c0_64] : memref<1x128xf32, #tpu.memory_space<vmem>>, vector<1x128xf32>
    %91 = vector.broadcast %90 : vector<1x128xf32> to vector<8x128xf32>
    %92 = arith.addf %89, %91 : vector<8x128xf32>
    %c0_65 = arith.constant 0 : index
    %c0_66 = arith.constant 0 : index
    %93 = vector.load %arg22[%c0_65, %c0_66] : memref<8x128xf32, #tpu.memory_space<vmem>>, vector<8x128xf32>
    tpu.vector_store %arg22[%c0_65, %c0_66], %92 {strides = array<i32>} : memref<8x128xf32, #tpu.memory_space<vmem>>, vector<8x128xf32>,
    %94 = tpu.iota {dimensions = array<i32: 1>} : vector<8x128xi32>
    %c8_i32 = arith.constant 8 : i32
    %95 = vector.broadcast %c8_i32 : i32 to vector<8x128xi32>
    %96 = arith.cmpi slt, %94, %95 : vector<8x128xi32>
    %cst_67 = arith.constant -1.000000e+30 : f32
    %97 = vector.broadcast %cst_67 : f32 to vector<8x128xf32>
    %98 = arith.select %96, %92, %97 : vector<8x128xi1>, vector<8x128xf32>
    %cst_68 = arith.constant dense<0xFF800000> : vector<8xf32>
    %99 = vector.multi_reduction <maximumf>, %98, %cst_68 [1] : vector<8x128xf32> to vector<8xf32>
    %100 = vector.shape_cast %99 : vector<8xf32> to vector<8x1xf32>
    %101 = vector.broadcast %100 : vector<8x1xf32> to vector<8x128xf32>
    %102 = arith.subf %98, %101 : vector<8x128xf32>
    %103 = math.exp %102 : vector<8x128xf32>
    %cst_69 = arith.constant dense<0.000000e+00> : vector<8xf32>
    %104 = vector.multi_reduction <add>, %103, %cst_69 [1] : vector<8x128xf32> to vector<8xf32>
    %105 = vector.shape_cast %104 : vector<8xf32> to vector<8x1xf32>
    %106 = math.log %105 : vector<8x1xf32>
    %107 = vector.broadcast %106 : vector<8x1xf32> to vector<8x128xf32>
    %108 = arith.subf %102, %107 : vector<8x128xf32>
    %c0_70 = arith.constant 0 : index
    %c0_71 = arith.constant 0 : index
    %109 = vector.load %arg23[%c0_70, %c0_71] : memref<8x128xf32, #tpu.memory_space<vmem>>, vector<8x128xf32>
    tpu.vector_store %arg23[%c0_70, %c0_71], %108 {strides = array<i32>} : memref<8x128xf32, #tpu.memory_space<vmem>>, vector<8x128xf32>,
    return
  }
}

</mosaic_0001>

<llo_original>
// kernel: fixed_gin_forward.1
$region0: #{fixed_gin_forward.1}
  #allocation0 [shape = 'u32[]', space=smem, size = 0x4, offset = 0x4, fixed_abs, tag = 'smem constant byte address 0x4 - core index']
  #allocation1 [shape = 'u32[144,128]{1,0:T(1,128)}', space=vmem, size = 0x12000, scoped, tag = 'internal scratch']
  %s0 = inlined_call_operand.vmem [shape: bf16[128,128], index: 0, kind: input, shape index: {}]
  %s1 = inlined_call_operand.vmem [shape: bf16[128,128], index: 1, kind: input, shape index: {}]
  %s2 = inlined_call_operand.vmem [shape: bf16[8,128], index: 2, kind: input, shape index: {}]
  %s3 = inlined_call_operand.vmem [shape: f32[8,1], index: 3, kind: input, shape index: {}]
  %s4 = inlined_call_operand.vmem [shape: bf16[128,128], index: 4, kind: input, shape index: {}]
  %s5 = inlined_call_operand.vmem [shape: f32[1,128], index: 5, kind: input, shape index: {}]
  %s6 = inlined_call_operand.vmem [shape: bf16[128,128], index: 6, kind: input, shape index: {}]
  %s7 = inlined_call_operand.vmem [shape: f32[1,128], index: 7, kind: input, shape index: {}]
  %s8 = inlined_call_operand.vmem [shape: bf16[128,128], index: 8, kind: input, shape index: {}]
  %s9 = inlined_call_operand.vmem [shape: f32[1,128], index: 9, kind: input, shape index: {}]
  %s10 = inlined_call_operand.vmem [shape: bf16[128,128], index: 10, kind: input, shape index: {}]
  %s11 = inlined_call_operand.vmem [shape: f32[1,128], index: 11, kind: input, shape index: {}]
  %s12 = inlined_call_operand.vmem [shape: bf16[128,128], index: 12, kind: input, shape index: {}]
  %s13 = inlined_call_operand.vmem [shape: f32[1,128], index: 13, kind: input, shape index: {}]
  %s14 = inlined_call_operand.vmem [shape: bf16[128,128], index: 14, kind: input, shape index: {}]
  %s15 = inlined_call_operand.vmem [shape: f32[1,128], index: 15, kind: input, shape index: {}]
  %s16 = inlined_call_operand.vmem [shape: bf16[128,128], index: 16, kind: input, shape index: {}]
  %s17 = inlined_call_operand.vmem [shape: bf16[128,128], index: 17, kind: input, shape index: {}]
  %s18 = inlined_call_operand.vmem [shape: bf16[128,128], index: 18, kind: input, shape index: {}]
  %s19 = inlined_call_operand.vmem [shape: f32[1,128], index: 19, kind: input, shape index: {}]
  %s20 = inlined_call_operand.vmem [shape: bf16[128,128], index: 20, kind: input, shape index: {}]
  %s21 = inlined_call_operand.vmem [shape: f32[1,128], index: 21, kind: input, shape index: {}]
  %s22 = inlined_call_operand.vmem [shape: f32[8,128], index: 22, kind: output, shape index: {0}]
  %s23 = inlined_call_operand.vmem [shape: f32[8,128], index: 23, kind: output, shape index: {1}]
  %24 = xla_tuple %s22, %s23
  %s25 = sld [smem:[#allocation0]]
  $region106: #{fixed_gin_forward.1} parent=0
    _
  %s27 = ssub.s32 1, %s25
  %s28 = scalar_select 0, %s27, %s25
  // Predicated region
  $region2: #{fixed_gin_forward.1} parent=0 // pred_check
    _
  $region3: #{fixed_gin_forward.1} parent=0 // pred_check_branch
    %30 = sbr.rel (0) target = $region5
  $region4: #{fixed_gin_forward.1} parent=0 // pred_region
    _
  $region5: #{fixed_gin_forward.1} parent=0 // pred_fallthru
    _
  // Predicated region
  $region6: #{fixed_gin_forward.1} parent=0 // pred_check
    _
  $region7: #{fixed_gin_forward.1} parent=0 // pred_check_branch
    %32 = sbr.rel (0) target = $region9
  $region8: #{fixed_gin_forward.1} parent=0 // pred_region
    _
  $region9: #{fixed_gin_forward.1} parent=0 // pred_fallthru
    _
  // Predicated region
  $region10: #{fixed_gin_forward.1} parent=0 // pred_check
    _
  $region11: #{fixed_gin_forward.1} parent=0 // pred_check_branch
    %34 = sbr.rel (0) target = $region13
  $region12: #{fixed_gin_forward.1} parent=0 // pred_region
    _
  $region13: #{fixed_gin_forward.1} parent=0 // pred_fallthru
    _
  // Predicated region
  $region14: #{fixed_gin_forward.1} parent=0 // pred_check
    _
  $region15: #{fixed_gin_forward.1} parent=0 // pred_check_branch
    %36 = sbr.rel (0) target = $region17
  $region16: #{fixed_gin_forward.1} parent=0 // pred_region
    _
  $region17: #{fixed_gin_forward.1} parent=0 // pred_fallthru
    _
  // Predicated region
  $region18: #{fixed_gin_forward.1} parent=0 // pred_check
    _
  $region19: #{fixed_gin_forward.1} parent=0 // pred_check_branch
    %38 = sbr.rel (0) target = $region21
  $region20: #{fixed_gin_forward.1} parent=0 // pred_region
    _
  $region21: #{fixed_gin_forward.1} parent=0 // pred_fallthru
    _
  // Predicated region
  $region22: #{fixed_gin_forward.1} parent=0 // pred_check
    _
  $region23: #{fixed_gin_forward.1} parent=0 // pred_check_branch
    %40 = sbr.rel (0) target = $region25
  $region24: #{fixed_gin_forward.1} parent=0 // pred_region
    _
  $region25: #{fixed_gin_forward.1} parent=0 // pred_fallthru
    _
  // Predicated region
  $region26: #{fixed_gin_forward.1} parent=0 // pred_check
    _
  $region27: #{fixed_gin_forward.1} parent=0 // pred_check_branch
    %42 = sbr.rel (0) target = $region29
  $region28: #{fixed_gin_forward.1} parent=0 // pred_region
    _
  $region29: #{fixed_gin_forward.1} parent=0 // pred_fallthru
    _
  // Predicated region
  $region30: #{fixed_gin_forward.1} parent=0 // pred_check
    _
  $region31: #{fixed_gin_forward.1} parent=0 // pred_check_branch
    %44 = sbr.rel (0) target = $region33
  $region32: #{fixed_gin_forward.1} parent=0 // pred_region
    _
  $region33: #{fixed_gin_forward.1} parent=0 // pred_fallthru
    _
  // Predicated region
  $region34: #{fixed_gin_forward.1} parent=0 // pred_check
    _
  $region35: #{fixed_gin_forward.1} parent=0 // pred_check_branch
    %46 = sbr.rel (0) target = $region37
  $region36: #{fixed_gin_forward.1} parent=0 // pred_region
    _
  $region37: #{fixed_gin_forward.1} parent=0 // pred_fallthru
    _
  // Predicated region
  $region38: #{fixed_gin_forward.1} parent=0 // pred_check
    _
  $region39: #{fixed_gin_forward.1} parent=0 // pred_check_branch
    %48 = sbr.rel (0) target = $region41
  $region40: #{fixed_gin_forward.1} parent=0 // pred_region
    _
  $region41: #{fixed_gin_forward.1} parent=0 // pred_fallthru
    _
  // Predicated region
  $region42: #{fixed_gin_forward.1} parent=0 // pred_check
    _
  $region43: #{fixed_gin_forward.1} parent=0 // pred_check_branch
    %50 = sbr.rel (0) target = $region45
  $region44: #{fixed_gin_forward.1} parent=0 // pred_region
    _
  $region45: #{fixed_gin_forward.1} parent=0 // pred_fallthru
    _
  // Predicated region
  $region46: #{fixed_gin_forward.1} parent=0 // pred_check
    _
  $region47: #{fixed_gin_forward.1} parent=0 // pred_check_branch
    %52 = sbr.rel (0) target = $region49
  $region48: #{fixed_gin_forward.1} parent=0 // pred_region
    _
  $region49: #{fixed_gin_forward.1} parent=0 // pred_fallthru
    _
  // Predicated region
  $region50: #{fixed_gin_forward.1} parent=0 // pred_check
    _
  $region51: #{fixed_gin_forward.1} parent=0 // pred_check_branch
    %54 = sbr.rel (0) target = $region53
  $region52: #{fixed_gin_forward.1} parent=0 // pred_region
    _
  $region53: #{fixed_gin_forward.1} parent=0 // pred_fallthru
    _
  // Predicated region
  $region54: #{fixed_gin_forward.1} parent=0 // pred_check
    _
  $region55: #{fixed_gin_forward.1} parent=0 // pred_check_branch
    %56 = sbr.rel (0) target = $region57
  $region56: #{fixed_gin_forward.1} parent=0 // pred_region
    _
  $region57: #{fixed_gin_forward.1} parent=0 // pred_fallthru
    _
  // Predicated region
  $region58: #{fixed_gin_forward.1} parent=0 // pred_check
    _
  $region59: #{fixed_gin_forward.1} parent=0 // pred_check_branch
    %58 = sbr.rel (0) target = $region61
  $region60: #{fixed_gin_forward.1} parent=0 // pred_region
    _
  $region61: #{fixed_gin_forward.1} parent=0 // pred_fallthru
    _
  // Predicated region
  $region62: #{fixed_gin_forward.1} parent=0 // pred_check
    _
  $region63: #{fixed_gin_forward.1} parent=0 // pred_check_branch
    %60 = sbr.rel (0) target = $region65
  $region64: #{fixed_gin_forward.1} parent=0 // pred_region
    _
  $region65: #{fixed_gin_forward.1} parent=0 // pred_fallthru
    _
  // Predicated region
  $region66: #{fixed_gin_forward.1} parent=0 // pred_check
    _
  $region67: #{fixed_gin_forward.1} parent=0 // pred_check_branch
    %62 = sbr.rel (0) target = $region69
  $region68: #{fixed_gin_forward.1} parent=0 // pred_region
    _
  $region69: #{fixed_gin_forward.1} parent=0 // pred_fallthru
    _
  // Predicated region
  $region70: #{fixed_gin_forward.1} parent=0 // pred_check
    _
  $region71: #{fixed_gin_forward.1} parent=0 // pred_check_branch
    %64 = sbr.rel (0) target = $region73
  $region72: #{fixed_gin_forward.1} parent=0 // pred_region
    _
  $region73: #{fixed_gin_forward.1} parent=0 // pred_fallthru
    _
  // Predicated region
  $region74: #{fixed_gin_forward.1} parent=0 // pred_check
    _
  $region75: #{fixed_gin_forward.1} parent=0 // pred_check_branch
    %66 = sbr.rel (0) target = $region77
  $region76: #{fixed_gin_forward.1} parent=0 // pred_region
    _
  $region77: #{fixed_gin_forward.1} parent=0 // pred_fallthru
    _
  // Predicated region
  $region78: #{fixed_gin_forward.1} parent=0 // pred_check
    _
  $region79: #{fixed_gin_forward.1} parent=0 // pred_check_branch
    %68 = sbr.rel (0) target = $region81
  $region80: #{fixed_gin_forward.1} parent=0 // pred_region
    _
  $region81: #{fixed_gin_forward.1} parent=0 // pred_fallthru
    _
  // Predicated region
  $region82: #{fixed_gin_forward.1} parent=0 // pred_check
    _
  $region83: #{fixed_gin_forward.1} parent=0 // pred_check_branch
    %70 = sbr.rel (0) target = $region85
  $region84: #{fixed_gin_forward.1} parent=0 // pred_region
    _
  $region85: #{fixed_gin_forward.1} parent=0 // pred_fallthru
    _
  // Predicated region
  $region86: #{fixed_gin_forward.1} parent=0 // pred_check
    _
  $region87: #{fixed_gin_forward.1} parent=0 // pred_check_branch
    %72 = sbr.rel (0) target = $region89
  $region88: #{fixed_gin_forward.1} parent=0 // pred_region
    _
  $region89: #{fixed_gin_forward.1} parent=0 // pred_fallthru
    _
  %v74 = vld [vmem:[%s0] sm:$0xf]
  %v75 = vld [vmem:[%s0 + $0x4] sm:$0xf]
  %v76 = vld [vmem:[%s0 + $0x8] sm:$0xf]
  %v77 = vld [vmem:[%s0 + $0xc] sm:$0xf]
  %v78 = vld [vmem:[%s0 + $0x10] sm:$0xf]
  %v79 = vld [vmem:[%s0 + $0x14] sm:$0xf]
  %v80 = vld [vmem:[%s0 + $0x18] sm:$0xf]
  %v81 = vld [vmem:[%s0 + $0x1c] sm:$0xf]
  %v82 = vld [vmem:[%s0 + $0x20] sm:$0xf]
  %v83 = vld [vmem:[%s0 + $0x24] sm:$0xf]
  %v84 = vld [vmem:[%s0 + $0x28] sm:$0xf]
  %v85 = vld [vmem:[%s0 + $0x2c] sm:$0xf]
  %v86 = vld [vmem:[%s0 + $0x30] sm:$0xf]
  %v87 = vld [vmem:[%s0 + $0x34] sm:$0xf]
  %v88 = vld [vmem:[%s0 + $0x38] sm:$0xf]
  %v89 = vld [vmem:[%s0 + $0x3c] sm:$0xf]
  %v90 = vld [vmem:[%s1] sm:$0xf]
  %v91 = vld [vmem:[%s1 + $0x4] sm:$0xf]
  %v92 = vld [vmem:[%s1 + $0x8] sm:$0xf]
  %v93 = vld [vmem:[%s1 + $0xc] sm:$0xf]
  %v94 = vld [vmem:[%s1 + $0x10] sm:$0xf]
  %v95 = vld [vmem:[%s1 + $0x14] sm:$0xf]
  %v96 = vld [vmem:[%s1 + $0x18] sm:$0xf]
  %v97 = vld [vmem:[%s1 + $0x1c] sm:$0xf]
  %v98 = vld [vmem:[%s1 + $0x20] sm:$0xf]
  %v99 = vld [vmem:[%s1 + $0x24] sm:$0xf]
  %v100 = vld [vmem:[%s1 + $0x28] sm:$0xf]
  %v101 = vld [vmem:[%s1 + $0x2c] sm:$0xf]
  %v102 = vld [vmem:[%s1 + $0x30] sm:$0xf]
  %v103 = vld [vmem:[%s1 + $0x34] sm:$0xf]
  %v104 = vld [vmem:[%s1 + $0x38] sm:$0xf]
  %v105 = vld [vmem:[%s1 + $0x3c] sm:$0xf]
  %v106 = vunpack.c.l.bf16 %v90
  %v107 = vunpack.c.l.bf16 %v91
  %v108 = vunpack.c.l.bf16 %v92
  %v109 = vunpack.c.l.bf16 %v93
  %v110 = vunpack.c.l.bf16 %v94
  %v111 = vunpack.c.l.bf16 %v95
  %v112 = vunpack.c.l.bf16 %v96
  %v113 = vunpack.c.l.bf16 %v97
  %v114 = vunpack.c.l.bf16 %v98
  %v115 = vunpack.c.l.bf16 %v99
  %v116 = vunpack.c.l.bf16 %v100
  %v117 = vunpack.c.l.bf16 %v101
  %v118 = vunpack.c.l.bf16 %v102
  %v119 = vunpack.c.l.bf16 %v103
  %v120 = vunpack.c.l.bf16 %v104
  %v121 = vunpack.c.l.bf16 %v105
  %v138 = vunpack.c.l.b16 %v74
  %v139 = vunpack.c.l.b16 %v75
  %v140 = vunpack.c.l.b16 %v76
  %v141 = vunpack.c.l.b16 %v77
  %v142 = vunpack.c.l.b16 %v78
  %v143 = vunpack.c.l.b16 %v79
  %v144 = vunpack.c.l.b16 %v80
  %v145 = vunpack.c.l.b16 %v81
  %v146 = vunpack.c.l.b16 %v82
  %v147 = vunpack.c.l.b16 %v83
  %v148 = vunpack.c.l.b16 %v84
  %v149 = vunpack.c.l.b16 %v85
  %v150 = vunpack.c.l.b16 %v86
  %v151 = vunpack.c.l.b16 %v87
  %v152 = vunpack.c.l.b16 %v88
  %v153 = vunpack.c.l.b16 %v89
  %v154 = vpack.c.b16 %v139, %v138
  %v155 = vpack.c.b16 %v141, %v140
  %v156 = vpack.c.b16 %v143, %v142
  %v157 = vpack.c.b16 %v145, %v144
  %v158 = vpack.c.b16 %v147, %v146
  %v159 = vpack.c.b16 %v149, %v148
  %v160 = vpack.c.b16 %v151, %v150
  %v161 = vpack.c.b16 %v153, %v152
  %v186 = vunpack.c.l.b16 %v90
  %v187 = vunpack.c.l.b16 %v91
  %v188 = vunpack.c.l.b16 %v92
  %v189 = vunpack.c.l.b16 %v93
  %v190 = vunpack.c.l.b16 %v94
  %v191 = vunpack.c.l.b16 %v95
  %v192 = vunpack.c.l.b16 %v96
  %v193 = vunpack.c.l.b16 %v97
  %v194 = vunpack.c.l.b16 %v98
  %v195 = vunpack.c.l.b16 %v99
  %v196 = vunpack.c.l.b16 %v100
  %v197 = vunpack.c.l.b16 %v101
  %v198 = vunpack.c.l.b16 %v102
  %v199 = vunpack.c.l.b16 %v103
  %v200 = vunpack.c.l.b16 %v104
  %v201 = vunpack.c.l.b16 %v105
  %v202 = vpack.c.b16 %v187, %v186
  %v203 = vpack.c.b16 %v189, %v188
  %v204 = vpack.c.b16 %v191, %v190
  %v205 = vpack.c.b16 %v193, %v192
  %v206 = vpack.c.b16 %v195, %v194
  %v207 = vpack.c.b16 %v197, %v196
  %v208 = vpack.c.b16 %v199, %v198
  %v209 = vpack.c.b16 %v201, %v200
  %218 = vmatprep.subr.bf16.mxu0 0
  %219 = vmatpush1.bf16.msra.mxu0 %v202
  %220 = vmatprep.subr.bf16.mxu0 0
  %221 = vmatpush1.bf16.msra.mxu0 %v203
  %222 = vmatprep.subr.bf16.mxu0 0
  %223 = vmatpush1.bf16.msra.mxu0 %v204
  %224 = vmatprep.subr.bf16.mxu0 0
  %225 = vmatpush1.bf16.msra.mxu0 %v205
  %226 = vmatprep.subr.bf16.mxu0 0
  %227 = vmatpush1.bf16.msra.mxu0 %v206
  %228 = vmatprep.subr.bf16.mxu0 0
  %229 = vmatpush1.bf16.msra.mxu0 %v207
  %230 = vmatprep.subr.bf16.mxu0 0
  %231 = vmatpush1.bf16.msra.mxu0 %v208
  %232 = vmatprep.subr.bf16.mxu0 0
  %233 = vmatpush1.bf16.msra.mxu0 %v209
  %234 = vmatprep.subr.bf16.mxu0 0
  %235 = vmatpush1.bf16.msra.mxu0 0
  %236 = vmatprep.subr.bf16.mxu0 0
  %237 = vmatpush1.bf16.msra.mxu0 0
  %238 = vmatprep.subr.bf16.mxu0 0
  %239 = vmatpush1.bf16.msra.mxu0 0
  %240 = vmatprep.subr.bf16.mxu0 0
  %241 = vmatpush1.bf16.msra.mxu0 0
  %242 = vmatprep.subr.bf16.mxu0 0
  %243 = vmatpush1.bf16.msra.mxu0 0
  %244 = vmatprep.subr.bf16.mxu0 0
  %245 = vmatpush1.bf16.msra.mxu0 0
  %246 = vmatprep.subr.bf16.mxu0 0
  %247 = vmatpush1.bf16.msra.mxu0 0
  %248 = vmatprep.subr.bf16.mxu0 0
  %249 = vmatpush1.bf16.msra.mxu0 0
  %250 = vmatprep.mubr.bf16.mxu0 0
  %251 = vmatmul.mubr.bf16.gmra.mrb[0].mxu0 %v154
  %v252 = vpop.f32.mrb[0].mxu0
  %v253 = vadd.f32 0.0, %v252
  %v254 = vpop.f32.mrb[0].mxu0
  %v255 = vpop.f32.mrb[0].mxu0
  %v256 = vadd.f32 0.0, %v255
  %v257 = vpop.f32.mrb[0].mxu0
  %258 = vmatprep.mubr.bf16.mxu0 0
  %259 = vmatmul.mubr.bf16.gmra.mrb[0].mxu0 %v155
  %v260 = vpop.f32.mrb[0].mxu0
  %v261 = vadd.f32 0.0, %v260
  %v262 = vpop.f32.mrb[0].mxu0
  %v263 = vpop.f32.mrb[0].mxu0
  %v264 = vadd.f32 0.0, %v263
  %v265 = vpop.f32.mrb[0].mxu0
  %266 = vmatprep.mubr.bf16.mxu0 0
  %267 = vmatmul.mubr.bf16.gmra.mrb[0].mxu0 %v156
  %v268 = vpop.f32.mrb[0].mxu0
  %v269 = vadd.f32 0.0, %v268
  %v270 = vpop.f32.mrb[0].mxu0
  %v271 = vpop.f32.mrb[0].mxu0
  %v272 = vadd.f32 0.0, %v271
  %v273 = vpop.f32.mrb[0].mxu0
  %274 = vmatprep.mubr.bf16.mxu0 0
  %275 = vmatmul.mubr.bf16.gmra.mrb[0].mxu0 %v157
  %v276 = vpop.f32.mrb[0].mxu0
  %v277 = vadd.f32 0.0, %v276
  %v278 = vpop.f32.mrb[0].mxu0
  %v279 = vpop.f32.mrb[0].mxu0
  %v280 = vadd.f32 0.0, %v279
  %v281 = vpop.f32.mrb[0].mxu0
  %282 = vmatprep.mubr.bf16.mxu0 0
  %283 = vmatmul.mubr.bf16.gmra.mrb[0].mxu0 %v158
  %v284 = vpop.f32.mrb[0].mxu0
  %v285 = vadd.f32 0.0, %v284
  %v286 = vpop.f32.mrb[0].mxu0
  %v287 = vpop.f32.mrb[0].mxu0
  %v288 = vadd.f32 0.0, %v287
  %v289 = vpop.f32.mrb[0].mxu0
  %290 = vmatprep.mubr.bf16.mxu0 0
  %291 = vmatmul.mubr.bf16.gmra.mrb[0].mxu0 %v159
  %v292 = vpop.f32.mrb[0].mxu0
  %v293 = vadd.f32 0.0, %v292
  %v294 = vpop.f32.mrb[0].mxu0
  %v295 = vpop.f32.mrb[0].mxu0
  %v296 = vadd.f32 0.0, %v295
  %v297 = vpop.f32.mrb[0].mxu0
  %298 = vmatprep.mubr.bf16.mxu0 0
  %299 = vmatmul.mubr.bf16.gmra.mrb[0].mxu0 %v160
  %v300 = vpop.f32.mrb[0].mxu0
  %v301 = vadd.f32 0.0, %v300
  %v302 = vpop.f32.mrb[0].mxu0
  %v303 = vpop.f32.mrb[0].mxu0
  %v304 = vadd.f32 0.0, %v303
  %v305 = vpop.f32.mrb[0].mxu0
  %306 = vmatprep.mubr.bf16.mxu0 0
  %307 = vmatmul.mubr.bf16.gmra.mrb[0].mxu0 %v161
  %v308 = vpop.f32.mrb[0].mxu0
  %v309 = vadd.f32 0.0, %v308
  %v310 = vpop.f32.mrb[0].mxu0
  %v311 = vpop.f32.mrb[0].mxu0
  %v312 = vadd.f32 0.0, %v311
  %v313 = vpop.f32.mrb[0].mxu0
  %314 = vdwg.mxu0
  %v315 = vadd.f32 %v106, %v253
  %v316 = vadd.f32 %v107, %v256
  %v317 = vadd.f32 %v108, %v261
  %v318 = vadd.f32 %v109, %v264
  %v319 = vadd.f32 %v110, %v269
  %v320 = vadd.f32 %v111, %v272
  %v321 = vadd.f32 %v112, %v277
  %v322 = vadd.f32 %v113, %v280
  %v323 = vadd.f32 %v114, %v285
  %v324 = vadd.f32 %v115, %v288
  %v325 = vadd.f32 %v116, %v293
  %v326 = vadd.f32 %v117, %v296
  %v327 = vadd.f32 %v118, %v301
  %v328 = vadd.f32 %v119, %v304
  %v329 = vadd.f32 %v120, %v309
  %v330 = vadd.f32 %v121, %v312
  %v331 = vpack.c.bf16 %v316, %v315
  %v332 = vpack.c.bf16 %v318, %v317
  %v333 = vpack.c.bf16 %v320, %v319
  %v334 = vpack.c.bf16 %v322, %v321
  %v335 = vpack.c.bf16 %v324, %v323
  %v336 = vpack.c.bf16 %v326, %v325
  %v337 = vpack.c.bf16 %v328, %v327
  %v338 = vpack.c.bf16 %v330, %v329
  %v339 = vld [vmem:[%s4] sm:$0xf]
  %v340 = vld [vmem:[%s4 + $0x4] sm:$0xf]
  %v341 = vld [vmem:[%s4 + $0x8] sm:$0xf]
  %v342 = vld [vmem:[%s4 + $0xc] sm:$0xf]
  %v343 = vld [vmem:[%s4 + $0x10] sm:$0xf]
  %v344 = vld [vmem:[%s4 + $0x14] sm:$0xf]
  %v345 = vld [vmem:[%s4 + $0x18] sm:$0xf]
  %v346 = vld [vmem:[%s4 + $0x1c] sm:$0xf]
  %v347 = vld [vmem:[%s4 + $0x20] sm:$0xf]
  %v348 = vld [vmem:[%s4 + $0x24] sm:$0xf]
  %v349 = vld [vmem:[%s4 + $0x28] sm:$0xf]
  %v350 = vld [vmem:[%s4 + $0x2c] sm:$0xf]
  %v351 = vld [vmem:[%s4 + $0x30] sm:$0xf]
  %v352 = vld [vmem:[%s4 + $0x34] sm:$0xf]
  %v353 = vld [vmem:[%s4 + $0x38] sm:$0xf]
  %v354 = vld [vmem:[%s4 + $0x3c] sm:$0xf]
  %v355 = vld [vmem:[%s5] sm:$0x1]
  %v357 = vlaneseq
  %v358 = vshrl.u32 %v357, 7
  %v359 = vsub.s32 0, %v358
  %v360 = vrot.slane %v355, %v359
  %v378 = vunpack.c.l.b16 %v339
  %v379 = vunpack.c.l.b16 %v340
  %v380 = vunpack.c.l.b16 %v341
  %v381 = vunpack.c.l.b16 %v342
  %v382 = vunpack.c.l.b16 %v343
  %v383 = vunpack.c.l.b16 %v344
  %v384 = vunpack.c.l.b16 %v345
  %v385 = vunpack.c.l.b16 %v346
  %v386 = vunpack.c.l.b16 %v347
  %v387 = vunpack.c.l.b16 %v348
  %v388 = vunpack.c.l.b16 %v349
  %v389 = vunpack.c.l.b16 %v350
  %v390 = vunpack.c.l.b16 %v351
  %v391 = vunpack.c.l.b16 %v352
  %v392 = vunpack.c.l.b16 %v353
  %v393 = vunpack.c.l.b16 %v354
  %v394 = vpack.c.b16 %v379, %v378
  %v395 = vpack.c.b16 %v381, %v380
  %v396 = vpack.c.b16 %v383, %v382
  %v397 = vpack.c.b16 %v385, %v384
  %v398 = vpack.c.b16 %v387, %v386
  %v399 = vpack.c.b16 %v389, %v388
  %v400 = vpack.c.b16 %v391, %v390
  %v401 = vpack.c.b16 %v393, %v392
  %410 = vmatprep.subr.bf16.mxu0 0
  %411 = vmatpush1.bf16.msra.mxu0 %v394
  %412 = vmatprep.subr.bf16.mxu0 0
  %413 = vmatpush1.bf16.msra.mxu0 %v395
  %414 = vmatprep.subr.bf16.mxu0 0
  %415 = vmatpush1.bf16.msra.mxu0 %v396
  %416 = vmatprep.subr.bf16.mxu0 0
  %417 = vmatpush1.bf16.msra.mxu0 %v397
  %418 = vmatprep.subr.bf16.mxu0 0
  %419 = vmatpush1.bf16.msra.mxu0 %v398
  %420 = vmatprep.subr.bf16.mxu0 0
  %421 = vmatpush1.bf16.msra.mxu0 %v399
  %422 = vmatprep.subr.bf16.mxu0 0
  %423 = vmatpush1.bf16.msra.mxu0 %v400
  %424 = vmatprep.subr.bf16.mxu0 0
  %425 = vmatpush1.bf16.msra.mxu0 %v401
  %426 = vmatprep.subr.bf16.mxu0 0
  %427 = vmatpush1.bf16.msra.mxu0 0
  %428 = vmatprep.subr.bf16.mxu0 0
  %429 = vmatpush1.bf16.msra.mxu0 0
  %430 = vmatprep.subr.bf16.mxu0 0
  %431 = vmatpush1.bf16.msra.mxu0 0
  %432 = vmatprep.subr.bf16.mxu0 0
  %433 = vmatpush1.bf16.msra.mxu0 0
  %434 = vmatprep.subr.bf16.mxu0 0
  %435 = vmatpush1.bf16.msra.mxu0 0
  %436 = vmatprep.subr.bf16.mxu0 0
  %437 = vmatpush1.bf16.msra.mxu0 0
  %438 = vmatprep.subr.bf16.mxu0 0
  %439 = vmatpush1.bf16.msra.mxu0 0
  %440 = vmatprep.subr.bf16.mxu0 0
  %441 = vmatpush1.bf16.msra.mxu0 0
  %442 = vmatprep.mubr.bf16.mxu0 0
  %443 = vmatmul.mubr.bf16.gmra.mrb[0].mxu0 %v331
  %v444 = vpop.f32.mrb[0].mxu0
  %v445 = vadd.f32 %v360, %v444
  %v446 = vpop.f32.mrb[0].mxu0
  %v447 = vpop.f32.mrb[0].mxu0
  %v448 = vadd.f32 %v360, %v447
  %v449 = vpop.f32.mrb[0].mxu0
  %450 = vmatprep.mubr.bf16.mxu0 0
  %451 = vmatmul.mubr.bf16.gmra.mrb[0].mxu0 %v332
  %v452 = vpop.f32.mrb[0].mxu0
  %v453 = vadd.f32 %v360, %v452
  %v454 = vpop.f32.mrb[0].mxu0
  %v455 = vpop.f32.mrb[0].mxu0
  %v456 = vadd.f32 %v360, %v455
  %v457 = vpop.f32.mrb[0].mxu0
  %458 = vmatprep.mubr.bf16.mxu0 0
  %459 = vmatmul.mubr.bf16.gmra.mrb[0].mxu0 %v333
  %v460 = vpop.f32.mrb[0].mxu0
  %v461 = vadd.f32 %v360, %v460
  %v462 = vpop.f32.mrb[0].mxu0
  %v463 = vpop.f32.mrb[0].mxu0
  %v464 = vadd.f32 %v360, %v463
  %v465 = vpop.f32.mrb[0].mxu0
  %466 = vmatprep.mubr.bf16.mxu0 0
  %467 = vmatmul.mubr.bf16.gmra.mrb[0].mxu0 %v334
  %v468 = vpop.f32.mrb[0].mxu0
  %v469 = vadd.f32 %v360, %v468
  %v470 = vpop.f32.mrb[0].mxu0
  %v471 = vpop.f32.mrb[0].mxu0
  %v472 = vadd.f32 %v360, %v471
  %v473 = vpop.f32.mrb[0].mxu0
  %474 = vmatprep.mubr.bf16.mxu0 0
  %475 = vmatmul.mubr.bf16.gmra.mrb[0].mxu0 %v335
  %v476 = vpop.f32.mrb[0].mxu0
  %v477 = vadd.f32 %v360, %v476
  %v478 = vpop.f32.mrb[0].mxu0
  %v479 = vpop.f32.mrb[0].mxu0
  %v480 = vadd.f32 %v360, %v479
  %v481 = vpop.f32.mrb[0].mxu0
  %482 = vmatprep.mubr.bf16.mxu0 0
  %483 = vmatmul.mubr.bf16.gmra.mrb[0].mxu0 %v336
  %v484 = vpop.f32.mrb[0].mxu0
  %v485 = vadd.f32 %v360, %v484
  %v486 = vpop.f32.mrb[0].mxu0
  %v487 = vpop.f32.mrb[0].mxu0
  %v488 = vadd.f32 %v360, %v487
  %v489 = vpop.f32.mrb[0].mxu0
  %490 = vmatprep.mubr.bf16.mxu0 0
  %491 = vmatmul.mubr.bf16.gmra.mrb[0].mxu0 %v337
  %v492 = vpop.f32.mrb[0].mxu0
  %v493 = vadd.f32 %v360, %v492
  %v494 = vpop.f32.mrb[0].mxu0
  %v495 = vpop.f32.mrb[0].mxu0
  %v496 = vadd.f32 %v360, %v495
  %v497 = vpop.f32.mrb[0].mxu0
  %498 = vmatprep.mubr.bf16.mxu0 0
  %499 = vmatmul.mubr.bf16.gmra.mrb[0].mxu0 %v338
  %v500 = vpop.f32.mrb[0].mxu0
  %v501 = vadd.f32 %v360, %v500
  %v502 = vpop.f32.mrb[0].mxu0
  %v503 = vpop.f32.mrb[0].mxu0
  %v504 = vadd.f32 %v360, %v503
  %v505 = vpop.f32.mrb[0].mxu0
  %506 = vdwg.mxu0
  %v507 = vmax.f32 %v445, 0.0
  %v508 = vmax.f32 %v448, 0.0
  %v509 = vmax.f32 %v453, 0.0
  %v510 = vmax.f32 %v456, 0.0
  %v511 = vmax.f32 %v461, 0.0
  %v512 = vmax.f32 %v464, 0.0
  %v513 = vmax.f32 %v469, 0.0
  %v514 = vmax.f32 %v472, 0.0
  %v515 = vmax.f32 %v477, 0.0
  %v516 = vmax.f32 %v480, 0.0
  %v517 = vmax.f32 %v485, 0.0
  %v518 = vmax.f32 %v488, 0.0
  %v519 = vmax.f32 %v493, 0.0
  %v520 = vmax.f32 %v496, 0.0
  %v521 = vmax.f32 %v501, 0.0
  %v522 = vmax.f32 %v504, 0.0
  %v523 = vpack.c.bf16 %v508, %v507
  %v524 = vpack.c.bf16 %v510, %v509
  %v525 = vpack.c.bf16 %v512, %v511
  %v526 = vpack.c.bf16 %v514, %v513
  %v527 = vpack.c.bf16 %v516, %v515
  %v528 = vpack.c.bf16 %v518, %v517
  %v529 = vpack.c.bf16 %v520, %v519
  %v530 = vpack.c.bf16 %v522, %v521
  %v531 = vld [vmem:[%s6] sm:$0xf]
  %v532 = vld [vmem:[%s6 + $0x4] sm:$0xf]
  %v533 = vld [vmem:[%s6 + $0x8] sm:$0xf]
  %v534 = vld [vmem:[%s6 + $0xc] sm:$0xf]
  %v535 = vld [vmem:[%s6 + $0x10] sm:$0xf]
  %v536 = vld [vmem:[%s6 + $0x14] sm:$0xf]
  %v537 = vld [vmem:[%s6 + $0x18] sm:$0xf]
  %v538 = vld [vmem:[%s6 + $0x1c] sm:$0xf]
  %v539 = vld [vmem:[%s6 + $0x20] sm:$0xf]
  %v540 = vld [vmem:[%s6 + $0x24] sm:$0xf]
  %v541 = vld [vmem:[%s6 + $0x28] sm:$0xf]
  %v542 = vld [vmem:[%s6 + $0x2c] sm:$0xf]
  %v543 = vld [vmem:[%s6 + $0x30] sm:$0xf]
  %v544 = vld [vmem:[%s6 + $0x34] sm:$0xf]
  %v545 = vld [vmem:[%s6 + $0x38] sm:$0xf]
  %v546 = vld [vmem:[%s6 + $0x3c] sm:$0xf]
  %v547 = vld [vmem:[%s7] sm:$0x1]
  %v549 = vlaneseq
  %v550 = vshrl.u32 %v549, 7
  %v551 = vsub.s32 0, %v550
  %v552 = vrot.slane %v547, %v551
  %v570 = vunpack.c.l.b16 %v531
  %v571 = vunpack.c.l.b16 %v532
  %v572 = vunpack.c.l.b16 %v533
  %v573 = vunpack.c.l.b16 %v534
  %v574 = vunpack.c.l.b16 %v535
  %v575 = vunpack.c.l.b16 %v536
  %v576 = vunpack.c.l.b16 %v537
  %v577 = vunpack.c.l.b16 %v538
  %v578 = vunpack.c.l.b16 %v539
  %v579 = vunpack.c.l.b16 %v540
  %v580 = vunpack.c.l.b16 %v541
  %v581 = vunpack.c.l.b16 %v542
  %v582 = vunpack.c.l.b16 %v543
  %v583 = vunpack.c.l.b16 %v544
  %v584 = vunpack.c.l.b16 %v545
  %v585 = vunpack.c.l.b16 %v546
  %v586 = vpack.c.b16 %v571, %v570
  %v587 = vpack.c.b16 %v573, %v572
  %v588 = vpack.c.b16 %v575, %v574
  %v589 = vpack.c.b16 %v577, %v576
  %v590 = vpack.c.b16 %v579, %v578
  %v591 = vpack.c.b16 %v581, %v580
  %v592 = vpack.c.b16 %v583, %v582
  %v593 = vpack.c.b16 %v585, %v584
  %602 = vmatprep.subr.bf16.mxu0 0
  %603 = vmatpush1.bf16.msra.mxu0 %v586
  %604 = vmatprep.subr.bf16.mxu0 0
  %605 = vmatpush1.bf16.msra.mxu0 %v587
  %606 = vmatprep.subr.bf16.mxu0 0
  %607 = vmatpush1.bf16.msra.mxu0 %v588
  %608 = vmatprep.subr.bf16.mxu0 0
  %609 = vmatpush1.bf16.msra.mxu0 %v589
  %610 = vmatprep.subr.bf16.mxu0 0
  %611 = vmatpush1.bf16.msra.mxu0 %v590
  %612 = vmatprep.subr.bf16.mxu0 0
  %613 = vmatpush1.bf16.msra.mxu0 %v591
  %614 = vmatprep.subr.bf16.mxu0 0
  %615 = vmatpush1.bf16.msra.mxu0 %v592
  %616 = vmatprep.subr.bf16.mxu0 0
  %617 = vmatpush1.bf16.msra.mxu0 %v593
  %618 = vmatprep.subr.bf16.mxu0 0
  %619 = vmatpush1.bf16.msra.mxu0 0
  %620 = vmatprep.subr.bf16.mxu0 0
  %621 = vmatpush1.bf16.msra.mxu0 0
  %622 = vmatprep.subr.bf16.mxu0 0
  %623 = vmatpush1.bf16.msra.mxu0 0
  %624 = vmatprep.subr.bf16.mxu0 0
  %625 = vmatpush1.bf16.msra.mxu0 0
  %626 = vmatprep.subr.bf16.mxu0 0
  %627 = vmatpush1.bf16.msra.mxu0 0
  %628 = vmatprep.subr.bf16.mxu0 0
  %629 = vmatpush1.bf16.msra.mxu0 0
  %630 = vmatprep.subr.bf16.mxu0 0
  %631 = vmatpush1.bf16.msra.mxu0 0
  %632 = vmatprep.subr.bf16.mxu0 0
  %633 = vmatpush1.bf16.msra.mxu0 0
  %634 = vmatprep.mubr.bf16.mxu0 0
  %635 = vmatmul.mubr.bf16.gmra.mrb[0].mxu0 %v523
  %v636 = vpop.f32.mrb[0].mxu0
  %v637 = vadd.f32 %v552, %v636
  %v638 = vpop.f32.mrb[0].mxu0
  %v639 = vpop.f32.mrb[0].mxu0
  %v640 = vadd.f32 %v552, %v639
  %v641 = vpop.f32.mrb[0].mxu0
  %642 = vmatprep.mubr.bf16.mxu0 0
  %643 = vmatmul.mubr.bf16.gmra.mrb[0].mxu0 %v524
  %v644 = vpop.f32.mrb[0].mxu0
  %v645 = vadd.f32 %v552, %v644
  %v646 = vpop.f32.mrb[0].mxu0
  %v647 = vpop.f32.mrb[0].mxu0
  %v648 = vadd.f32 %v552, %v647
  %v649 = vpop.f32.mrb[0].mxu0
  %650 = vmatprep.mubr.bf16.mxu0 0
  %651 = vmatmul.mubr.bf16.gmra.mrb[0].mxu0 %v525
  %v652 = vpop.f32.mrb[0].mxu0
  %v653 = vadd.f32 %v552, %v652
  %v654 = vpop.f32.mrb[0].mxu0
  %v655 = vpop.f32.mrb[0].mxu0
  %v656 = vadd.f32 %v552, %v655
  %v657 = vpop.f32.mrb[0].mxu0
  %658 = vmatprep.mubr.bf16.mxu0 0
  %659 = vmatmul.mubr.bf16.gmra.mrb[0].mxu0 %v526
  %v660 = vpop.f32.mrb[0].mxu0
  %v661 = vadd.f32 %v552, %v660
  %v662 = vpop.f32.mrb[0].mxu0
  %v663 = vpop.f32.mrb[0].mxu0
  %v664 = vadd.f32 %v552, %v663
  %v665 = vpop.f32.mrb[0].mxu0
  %666 = vmatprep.mubr.bf16.mxu0 0
  %667 = vmatmul.mubr.bf16.gmra.mrb[0].mxu0 %v527
  %v668 = vpop.f32.mrb[0].mxu0
  %v669 = vadd.f32 %v552, %v668
  %v670 = vpop.f32.mrb[0].mxu0
  %v671 = vpop.f32.mrb[0].mxu0
  %v672 = vadd.f32 %v552, %v671
  %v673 = vpop.f32.mrb[0].mxu0
  %674 = vmatprep.mubr.bf16.mxu0 0
  %675 = vmatmul.mubr.bf16.gmra.mrb[0].mxu0 %v528
  %v676 = vpop.f32.mrb[0].mxu0
  %v677 = vadd.f32 %v552, %v676
  %v678 = vpop.f32.mrb[0].mxu0
  %v679 = vpop.f32.mrb[0].mxu0
  %v680 = vadd.f32 %v552, %v679
  %v681 = vpop.f32.mrb[0].mxu0
  %682 = vmatprep.mubr.bf16.mxu0 0
  %683 = vmatmul.mubr.bf16.gmra.mrb[0].mxu0 %v529
  %v684 = vpop.f32.mrb[0].mxu0
  %v685 = vadd.f32 %v552, %v684
  %v686 = vpop.f32.mrb[0].mxu0
  %v687 = vpop.f32.mrb[0].mxu0
  %v688 = vadd.f32 %v552, %v687
  %v689 = vpop.f32.mrb[0].mxu0
  %690 = vmatprep.mubr.bf16.mxu0 0
  %691 = vmatmul.mubr.bf16.gmra.mrb[0].mxu0 %v530
  %v692 = vpop.f32.mrb[0].mxu0
  %v693 = vadd.f32 %v552, %v692
  %v694 = vpop.f32.mrb[0].mxu0
  %v695 = vpop.f32.mrb[0].mxu0
  %v696 = vadd.f32 %v552, %v695
  %v697 = vpop.f32.mrb[0].mxu0
  %698 = vdwg.mxu0
  %v699 = vmax.f32 %v637, 0.0
  %v700 = vmax.f32 %v640, 0.0
  %v701 = vmax.f32 %v645, 0.0
  %v702 = vmax.f32 %v648, 0.0
  %v703 = vmax.f32 %v653, 0.0
  %v704 = vmax.f32 %v656, 0.0
  %v705 = vmax.f32 %v661, 0.0
  %v706 = vmax.f32 %v664, 0.0
  %v707 = vmax.f32 %v669, 0.0
  %v708 = vmax.f32 %v672, 0.0
  %v709 = vmax.f32 %v677, 0.0
  %v710 = vmax.f32 %v680, 0.0
  %v711 = vmax.f32 %v685, 0.0
  %v712 = vmax.f32 %v688, 0.0
  %v713 = vmax.f32 %v693, 0.0
  %v714 = vmax.f32 %v696, 0.0
  %v715 = vpack.c.bf16 %v700, %v699
  %v716 = vpack.c.bf16 %v702, %v701
  %v717 = vpack.c.bf16 %v704, %v703
  %v718 = vpack.c.bf16 %v706, %v705
  %v719 = vpack.c.bf16 %v708, %v707
  %v720 = vpack.c.bf16 %v710, %v709
  %v721 = vpack.c.bf16 %v712, %v711
  %v722 = vpack.c.bf16 %v714, %v713
  %723 = vmatprep.subr.bf16.mxu0 0
  %724 = vmatpush1.bf16.msra.mxu0 %v715
  %725 = vmatprep.subr.bf16.mxu0 0
  %726 = vmatpush1.bf16.msra.mxu0 %v716
  %727 = vmatprep.subr.bf16.mxu0 0
  %728 = vmatpush1.bf16.msra.mxu0 %v717
  %729 = vmatprep.subr.bf16.mxu0 0
  %730 = vmatpush1.bf16.msra.mxu0 %v718
  %731 = vmatprep.subr.bf16.mxu0 0
  %732 = vmatpush1.bf16.msra.mxu0 %v719
  %733 = vmatprep.subr.bf16.mxu0 0
  %734 = vmatpush1.bf16.msra.mxu0 %v720
  %735 = vmatprep.subr.bf16.mxu0 0
  %736 = vmatpush1.bf16.msra.mxu0 %v721
  %737 = vmatprep.subr.bf16.mxu0 0
  %738 = vmatpush1.bf16.msra.mxu0 %v722
  %739 = vmatprep.subr.bf16.mxu0 0
  %740 = vmatpush1.bf16.msra.mxu0 0
  %741 = vmatprep.subr.bf16.mxu0 0
  %742 = vmatpush1.bf16.msra.mxu0 0
  %743 = vmatprep.subr.bf16.mxu0 0
  %744 = vmatpush1.bf16.msra.mxu0 0
  %745 = vmatprep.subr.bf16.mxu0 0
  %746 = vmatpush1.bf16.msra.mxu0 0
  %747 = vmatprep.subr.bf16.mxu0 0
  %748 = vmatpush1.bf16.msra.mxu0 0
  %749 = vmatprep.subr.bf16.mxu0 0
  %750 = vmatpush1.bf16.msra.mxu0 0
  %751 = vmatprep.subr.bf16.mxu0 0
  %752 = vmatpush1.bf16.msra.mxu0 0
  %753 = vmatprep.subr.bf16.mxu0 0
  %754 = vmatpush1.bf16.msra.mxu0 0
  %755 = vmatprep.mubr.bf16.mxu0 0
  %756 = vmatmul.mubr.bf16.gmra.mrb[0].mxu0 %v154
  %v757 = vpop.f32.mrb[0].mxu0
  %v758 = vadd.f32 0.0, %v757
  %v759 = vpop.f32.mrb[0].mxu0
  %v760 = vpop.f32.mrb[0].mxu0
  %v761 = vadd.f32 0.0, %v760
  %v762 = vpop.f32.mrb[0].mxu0
  %763 = vmatprep.mubr.bf16.mxu0 0
  %764 = vmatmul.mubr.bf16.gmra.mrb[0].mxu0 %v155
  %v765 = vpop.f32.mrb[0].mxu0
  %v766 = vadd.f32 0.0, %v765
  %v767 = vpop.f32.mrb[0].mxu0
  %v768 = vpop.f32.mrb[0].mxu0
  %v769 = vadd.f32 0.0, %v768
  %v770 = vpop.f32.mrb[0].mxu0
  %771 = vmatprep.mubr.bf16.mxu0 0
  %772 = vmatmul.mubr.bf16.gmra.mrb[0].mxu0 %v156
  %v773 = vpop.f32.mrb[0].mxu0
  %v774 = vadd.f32 0.0, %v773
  %v775 = vpop.f32.mrb[0].mxu0
  %v776 = vpop.f32.mrb[0].mxu0
  %v777 = vadd.f32 0.0, %v776
  %v778 = vpop.f32.mrb[0].mxu0
  %779 = vmatprep.mubr.bf16.mxu0 0
  %780 = vmatmul.mubr.bf16.gmra.mrb[0].mxu0 %v157
  %v781 = vpop.f32.mrb[0].mxu0
  %v782 = vadd.f32 0.0, %v781
  %v783 = vpop.f32.mrb[0].mxu0
  %v784 = vpop.f32.mrb[0].mxu0
  %v785 = vadd.f32 0.0, %v784
  %v786 = vpop.f32.mrb[0].mxu0
  %787 = vmatprep.mubr.bf16.mxu0 0
  %788 = vmatmul.mubr.bf16.gmra.mrb[0].mxu0 %v158
  %v789 = vpop.f32.mrb[0].mxu0
  %v790 = vadd.f32 0.0, %v789
  %v791 = vpop.f32.mrb[0].mxu0
  %v792 = vpop.f32.mrb[0].mxu0
  %v793 = vadd.f32 0.0, %v792
  %v794 = vpop.f32.mrb[0].mxu0
  %795 = vmatprep.mubr.bf16.mxu0 0
  %796 = vmatmul.mubr.bf16.gmra.mrb[0].mxu0 %v159
  %v797 = vpop.f32.mrb[0].mxu0
  %v798 = vadd.f32 0.0, %v797
  %v799 = vpop.f32.mrb[0].mxu0
  %v800 = vpop.f32.mrb[0].mxu0
  %v801 = vadd.f32 0.0, %v800
  %v802 = vpop.f32.mrb[0].mxu0
  %803 = vmatprep.mubr.bf16.mxu0 0
  %804 = vmatmul.mubr.bf16.gmra.mrb[0].mxu0 %v160
  %v805 = vpop.f32.mrb[0].mxu0
  %v806 = vadd.f32 0.0, %v805
  %v807 = vpop.f32.mrb[0].mxu0
  %v808 = vpop.f32.mrb[0].mxu0
  %v809 = vadd.f32 0.0, %v808
  %v810 = vpop.f32.mrb[0].mxu0
  %811 = vmatprep.mubr.bf16.mxu0 0
  %812 = vmatmul.mubr.bf16.gmra.mrb[0].mxu0 %v161
  %v813 = vpop.f32.mrb[0].mxu0
  %v814 = vadd.f32 0.0, %v813
  %v815 = vpop.f32.mrb[0].mxu0
  %v816 = vpop.f32.mrb[0].mxu0
  %v817 = vadd.f32 0.0, %v816
  %v818 = vpop.f32.mrb[0].mxu0
  %819 = vdwg.mxu0
  %v820 = vadd.f32 %v699, %v758
  %v821 = vadd.f32 %v700, %v761
  %v822 = vadd.f32 %v701, %v766
  %v823 = vadd.f32 %v702, %v769
  %v824 = vadd.f32 %v703, %v774
  %v825 = vadd.f32 %v704, %v777
  %v826 = vadd.f32 %v705, %v782
  %v827 = vadd.f32 %v706, %v785
  %v828 = vadd.f32 %v707, %v790
  %v829 = vadd.f32 %v708, %v793
  %v830 = vadd.f32 %v709, %v798
  %v831 = vadd.f32 %v710, %v801
  %v832 = vadd.f32 %v711, %v806
  %v833 = vadd.f32 %v712, %v809
  %v834 = vadd.f32 %v713, %v814
  %v835 = vadd.f32 %v714, %v817
  %v836 = vpack.c.bf16 %v821, %v820
  %v837 = vpack.c.bf16 %v823, %v822
  %v838 = vpack.c.bf16 %v825, %v824
  %v839 = vpack.c.bf16 %v827, %v826
  %v840 = vpack.c.bf16 %v829, %v828
  %v841 = vpack.c.bf16 %v831, %v830
  %v842 = vpack.c.bf16 %v833, %v832
  %v843 = vpack.c.bf16 %v835, %v834
  %v844 = vld [vmem:[%s8] sm:$0xf]
  %v845 = vld [vmem:[%s8 + $0x4] sm:$0xf]
  %v846 = vld [vmem:[%s8 + $0x8] sm:$0xf]
  %v847 = vld [vmem:[%s8 + $0xc] sm:$0xf]
  %v848 = vld [vmem:[%s8 + $0x10] sm:$0xf]
  %v849 = vld [vmem:[%s8 + $0x14] sm:$0xf]
  %v850 = vld [vmem:[%s8 + $0x18] sm:$0xf]
  %v851 = vld [vmem:[%s8 + $0x1c] sm:$0xf]
  %v852 = vld [vmem:[%s8 + $0x20] sm:$0xf]
  %v853 = vld [vmem:[%s8 + $0x24] sm:$0xf]
  %v854 = vld [vmem:[%s8 + $0x28] sm:$0xf]
  %v855 = vld [vmem:[%s8 + $0x2c] sm:$0xf]
  %v856 = vld [vmem:[%s8 + $0x30] sm:$0xf]
  %v857 = vld [vmem:[%s8 + $0x34] sm:$0xf]
  %v858 = vld [vmem:[%s8 + $0x38] sm:$0xf]
  %v859 = vld [vmem:[%s8 + $0x3c] sm:$0xf]
  %v860 = vld [vmem:[%s9] sm:$0x1]
  %v862 = vlaneseq
  %v863 = vshrl.u32 %v862, 7
  %v864 = vsub.s32 0, %v863
  %v865 = vrot.slane %v860, %v864
  %v883 = vunpack.c.l.b16 %v844
  %v884 = vunpack.c.l.b16 %v845
  %v885 = vunpack.c.l.b16 %v846
  %v886 = vunpack.c.l.b16 %v847
  %v887 = vunpack.c.l.b16 %v848
  %v888 = vunpack.c.l.b16 %v849
  %v889 = vunpack.c.l.b16 %v850
  %v890 = vunpack.c.l.b16 %v851
  %v891 = vunpack.c.l.b16 %v852
  %v892 = vunpack.c.l.b16 %v853
  %v893 = vunpack.c.l.b16 %v854
  %v894 = vunpack.c.l.b16 %v855
  %v895 = vunpack.c.l.b16 %v856
  %v896 = vunpack.c.l.b16 %v857
  %v897 = vunpack.c.l.b16 %v858
  %v898 = vunpack.c.l.b16 %v859
  %v899 = vpack.c.b16 %v884, %v883
  %v900 = vpack.c.b16 %v886, %v885
  %v901 = vpack.c.b16 %v888, %v887
  %v902 = vpack.c.b16 %v890, %v889
  %v903 = vpack.c.b16 %v892, %v891
  %v904 = vpack.c.b16 %v894, %v893
  %v905 = vpack.c.b16 %v896, %v895
  %v906 = vpack.c.b16 %v898, %v897
  %915 = vmatprep.subr.bf16.mxu0 0
  %916 = vmatpush1.bf16.msra.mxu0 %v899
  %917 = vmatprep.subr.bf16.mxu0 0
  %918 = vmatpush1.bf16.msra.mxu0 %v900
  %919 = vmatprep.subr.bf16.mxu0 0
  %920 = vmatpush1.bf16.msra.mxu0 %v901
  %921 = vmatprep.subr.bf16.mxu0 0
  %922 = vmatpush1.bf16.msra.mxu0 %v902
  %923 = vmatprep.subr.bf16.mxu0 0
  %924 = vmatpush1.bf16.msra.mxu0 %v903
  %925 = vmatprep.subr.bf16.mxu0 0
  %926 = vmatpush1.bf16.msra.mxu0 %v904
  %927 = vmatprep.subr.bf16.mxu0 0
  %928 = vmatpush1.bf16.msra.mxu0 %v905
  %929 = vmatprep.subr.bf16.mxu0 0
  %930 = vmatpush1.bf16.msra.mxu0 %v906
  %931 = vmatprep.subr.bf16.mxu0 0
  %932 = vmatpush1.bf16.msra.mxu0 0
  %933 = vmatprep.subr.bf16.mxu0 0
  %934 = vmatpush1.bf16.msra.mxu0 0
  %935 = vmatprep.subr.bf16.mxu0 0
  %936 = vmatpush1.bf16.msra.mxu0 0
  %937 = vmatprep.subr.bf16.mxu0 0
  %938 = vmatpush1.bf16.msra.mxu0 0
  %939 = vmatprep.subr.bf16.mxu0 0
  %940 = vmatpush1.bf16.msra.mxu0 0
  %941 = vmatprep.subr.bf16.mxu0 0
  %942 = vmatpush1.bf16.msra.mxu0 0
  %943 = vmatprep.subr.bf16.mxu0 0
  %944 = vmatpush1.bf16.msra.mxu0 0
  %945 = vmatprep.subr.bf16.mxu0 0
  %946 = vmatpush1.bf16.msra.mxu0 0
  %947 = vmatprep.mubr.bf16.mxu0 0
  %948 = vmatmul.mubr.bf16.gmra.mrb[0].mxu0 %v836
  %v949 = vpop.f32.mrb[0].mxu0
  %v950 = vadd.f32 %v865, %v949
  %v951 = vpop.f32.mrb[0].mxu0
  %v952 = vpop.f32.mrb[0].mxu0
  %v953 = vadd.f32 %v865, %v952
  %v954 = vpop.f32.mrb[0].mxu0
  %955 = vmatprep.mubr.bf16.mxu0 0
  %956 = vmatmul.mubr.bf16.gmra.mrb[0].mxu0 %v837
  %v957 = vpop.f32.mrb[0].mxu0
  %v958 = vadd.f32 %v865, %v957
  %v959 = vpop.f32.mrb[0].mxu0
  %v960 = vpop.f32.mrb[0].mxu0
  %v961 = vadd.f32 %v865, %v960
  %v962 = vpop.f32.mrb[0].mxu0
  %963 = vmatprep.mubr.bf16.mxu0 0
  %964 = vmatmul.mubr.bf16.gmra.mrb[0].mxu0 %v838
  %v965 = vpop.f32.mrb[0].mxu0
  %v966 = vadd.f32 %v865, %v965
  %v967 = vpop.f32.mrb[0].mxu0
  %v968 = vpop.f32.mrb[0].mxu0
  %v969 = vadd.f32 %v865, %v968
  %v970 = vpop.f32.mrb[0].mxu0
  %971 = vmatprep.mubr.bf16.mxu0 0
  %972 = vmatmul.mubr.bf16.gmra.mrb[0].mxu0 %v839
  %v973 = vpop.f32.mrb[0].mxu0
  %v974 = vadd.f32 %v865, %v973
  %v975 = vpop.f32.mrb[0].mxu0
  %v976 = vpop.f32.mrb[0].mxu0
  %v977 = vadd.f32 %v865, %v976
  %v978 = vpop.f32.mrb[0].mxu0
  %979 = vmatprep.mubr.bf16.mxu0 0
  %980 = vmatmul.mubr.bf16.gmra.mrb[0].mxu0 %v840
  %v981 = vpop.f32.mrb[0].mxu0
  %v982 = vadd.f32 %v865, %v981
  %v983 = vpop.f32.mrb[0].mxu0
  %v984 = vpop.f32.mrb[0].mxu0
  %v985 = vadd.f32 %v865, %v984
  %v986 = vpop.f32.mrb[0].mxu0
  %987 = vmatprep.mubr.bf16.mxu0 0
  %988 = vmatmul.mubr.bf16.gmra.mrb[0].mxu0 %v841
  %v989 = vpop.f32.mrb[0].mxu0
  %v990 = vadd.f32 %v865, %v989
  %v991 = vpop.f32.mrb[0].mxu0
  %v992 = vpop.f32.mrb[0].mxu0
  %v993 = vadd.f32 %v865, %v992
  %v994 = vpop.f32.mrb[0].mxu0
  %995 = vmatprep.mubr.bf16.mxu0 0
  %996 = vmatmul.mubr.bf16.gmra.mrb[0].mxu0 %v842
  %v997 = vpop.f32.mrb[0].mxu0
  %v998 = vadd.f32 %v865, %v997
  %v999 = vpop.f32.mrb[0].mxu0
  %v1000 = vpop.f32.mrb[0].mxu0
  %v1001 = vadd.f32 %v865, %v1000
  %v1002 = vpop.f32.mrb[0].mxu0
  %1003 = vmatprep.mubr.bf16.mxu0 0
  %1004 = vmatmul.mubr.bf16.gmra.mrb[0].mxu0 %v843
  %v1005 = vpop.f32.mrb[0].mxu0
  %v1006 = vadd.f32 %v865, %v1005
  %v1007 = vpop.f32.mrb[0].mxu0
  %v1008 = vpop.f32.mrb[0].mxu0
  %v1009 = vadd.f32 %v865, %v1008
  %v1010 = vpop.f32.mrb[0].mxu0
  %1011 = vdwg.mxu0
  %v1012 = vmax.f32 %v950, 0.0
  %v1013 = vmax.f32 %v953, 0.0
  %v1014 = vmax.f32 %v958, 0.0
  %v1015 = vmax.f32 %v961, 0.0
  %v1016 = vmax.f32 %v966, 0.0
  %v1017 = vmax.f32 %v969, 0.0
  %v1018 = vmax.f32 %v974, 0.0
  %v1019 = vmax.f32 %v977, 0.0
  %v1020 = vmax.f32 %v982, 0.0
  %v1021 = vmax.f32 %v985, 0.0
  %v1022 = vmax.f32 %v990, 0.0
  %v1023 = vmax.f32 %v993, 0.0
  %v1024 = vmax.f32 %v998, 0.0
  %v1025 = vmax.f32 %v1001, 0.0
  %v1026 = vmax.f32 %v1006, 0.0
  %v1027 = vmax.f32 %v1009, 0.0
  %v1028 = vpack.c.bf16 %v1013, %v1012
  %v1029 = vpack.c.bf16 %v1015, %v1014
  %v1030 = vpack.c.bf16 %v1017, %v1016
  %v1031 = vpack.c.bf16 %v1019, %v1018
  %v1032 = vpack.c.bf16 %v1021, %v1020
  %v1033 = vpack.c.bf16 %v1023, %v1022
  %v1034 = vpack.c.bf16 %v1025, %v1024
  %v1035 = vpack.c.bf16 %v1027, %v1026
  %v1036 = vld [vmem:[%s10] sm:$0xf]
  %v1037 = vld [vmem:[%s10 + $0x4] sm:$0xf]
  %v1038 = vld [vmem:[%s10 + $0x8] sm:$0xf]
  %v1039 = vld [vmem:[%s10 + $0xc] sm:$0xf]
  %v1040 = vld [vmem:[%s10 + $0x10] sm:$0xf]
  %v1041 = vld [vmem:[%s10 + $0x14] sm:$0xf]
  %v1042 = vld [vmem:[%s10 + $0x18] sm:$0xf]
  %v1043 = vld [vmem:[%s10 + $0x1c] sm:$0xf]
  %v1044 = vld [vmem:[%s10 + $0x20] sm:$0xf]
  %v1045 = vld [vmem:[%s10 + $0x24] sm:$0xf]
  %v1046 = vld [vmem:[%s10 + $0x28] sm:$0xf]
  %v1047 = vld [vmem:[%s10 + $0x2c] sm:$0xf]
  %v1048 = vld [vmem:[%s10 + $0x30] sm:$0xf]
  %v1049 = vld [vmem:[%s10 + $0x34] sm:$0xf]
  %v1050 = vld [vmem:[%s10 + $0x38] sm:$0xf]
  %v1051 = vld [vmem:[%s10 + $0x3c] sm:$0xf]
  %v1052 = vld [vmem:[%s11] sm:$0x1]
  %v1054 = vlaneseq
  %v1055 = vshrl.u32 %v1054, 7
  %v1056 = vsub.s32 0, %v1055
  %v1057 = vrot.slane %v1052, %v1056
  %v1075 = vunpack.c.l.b16 %v1036
  %v1076 = vunpack.c.l.b16 %v1037
  %v1077 = vunpack.c.l.b16 %v1038
  %v1078 = vunpack.c.l.b16 %v1039
  %v1079 = vunpack.c.l.b16 %v1040
  %v1080 = vunpack.c.l.b16 %v1041
  %v1081 = vunpack.c.l.b16 %v1042
  %v1082 = vunpack.c.l.b16 %v1043
  %v1083 = vunpack.c.l.b16 %v1044
  %v1084 = vunpack.c.l.b16 %v1045
  %v1085 = vunpack.c.l.b16 %v1046
  %v1086 = vunpack.c.l.b16 %v1047
  %v1087 = vunpack.c.l.b16 %v1048
  %v1088 = vunpack.c.l.b16 %v1049
  %v1089 = vunpack.c.l.b16 %v1050
  %v1090 = vunpack.c.l.b16 %v1051
  %v1091 = vpack.c.b16 %v1076, %v1075
  %v1092 = vpack.c.b16 %v1078, %v1077
  %v1093 = vpack.c.b16 %v1080, %v1079
  %v1094 = vpack.c.b16 %v1082, %v1081
  %v1095 = vpack.c.b16 %v1084, %v1083
  %v1096 = vpack.c.b16 %v1086, %v1085
  %v1097 = vpack.c.b16 %v1088, %v1087
  %v1098 = vpack.c.b16 %v1090, %v1089
  %1107 = vmatprep.subr.bf16.mxu0 0
  %1108 = vmatpush1.bf16.msra.mxu0 %v1091
  %1109 = vmatprep.subr.bf16.mxu0 0
  %1110 = vmatpush1.bf16.msra.mxu0 %v1092
  %1111 = vmatprep.subr.bf16.mxu0 0
  %1112 = vmatpush1.bf16.msra.mxu0 %v1093
  %1113 = vmatprep.subr.bf16.mxu0 0
  %1114 = vmatpush1.bf16.msra.mxu0 %v1094
  %1115 = vmatprep.subr.bf16.mxu0 0
  %1116 = vmatpush1.bf16.msra.mxu0 %v1095
  %1117 = vmatprep.subr.bf16.mxu0 0
  %1118 = vmatpush1.bf16.msra.mxu0 %v1096
  %1119 = vmatprep.subr.bf16.mxu0 0
  %1120 = vmatpush1.bf16.msra.mxu0 %v1097
  %1121 = vmatprep.subr.bf16.mxu0 0
  %1122 = vmatpush1.bf16.msra.mxu0 %v1098
  %1123 = vmatprep.subr.bf16.mxu0 0
  %1124 = vmatpush1.bf16.msra.mxu0 0
  %1125 = vmatprep.subr.bf16.mxu0 0
  %1126 = vmatpush1.bf16.msra.mxu0 0
  %1127 = vmatprep.subr.bf16.mxu0 0
  %1128 = vmatpush1.bf16.msra.mxu0 0
  %1129 = vmatprep.subr.bf16.mxu0 0
  %1130 = vmatpush1.bf16.msra.mxu0 0
  %1131 = vmatprep.subr.bf16.mxu0 0
  %1132 = vmatpush1.bf16.msra.mxu0 0
  %1133 = vmatprep.subr.bf16.mxu0 0
  %1134 = vmatpush1.bf16.msra.mxu0 0
  %1135 = vmatprep.subr.bf16.mxu0 0
  %1136 = vmatpush1.bf16.msra.mxu0 0
  %1137 = vmatprep.subr.bf16.mxu0 0
  %1138 = vmatpush1.bf16.msra.mxu0 0
  %1139 = vmatprep.mubr.bf16.mxu0 0
  %1140 = vmatmul.mubr.bf16.gmra.mrb[0].mxu0 %v1028
  %v1141 = vpop.f32.mrb[0].mxu0
  %v1142 = vadd.f32 %v1057, %v1141
  %v1143 = vpop.f32.mrb[0].mxu0
  %v1144 = vpop.f32.mrb[0].mxu0
  %v1145 = vadd.f32 %v1057, %v1144
  %v1146 = vpop.f32.mrb[0].mxu0
  %1147 = vmatprep.mubr.bf16.mxu0 0
  %1148 = vmatmul.mubr.bf16.gmra.mrb[0].mxu0 %v1029
  %v1149 = vpop.f32.mrb[0].mxu0
  %v1150 = vadd.f32 %v1057, %v1149
  %v1151 = vpop.f32.mrb[0].mxu0
  %v1152 = vpop.f32.mrb[0].mxu0
  %v1153 = vadd.f32 %v1057, %v1152
  %v1154 = vpop.f32.mrb[0].mxu0
  %1155 = vmatprep.mubr.bf16.mxu0 0
  %1156 = vmatmul.mubr.bf16.gmra.mrb[0].mxu0 %v1030
  %v1157 = vpop.f32.mrb[0].mxu0
  %v1158 = vadd.f32 %v1057, %v1157
  %v1159 = vpop.f32.mrb[0].mxu0
  %v1160 = vpop.f32.mrb[0].mxu0
  %v1161 = vadd.f32 %v1057, %v1160
  %v1162 = vpop.f32.mrb[0].mxu0
  %1163 = vmatprep.mubr.bf16.mxu0 0
  %1164 = vmatmul.mubr.bf16.gmra.mrb[0].mxu0 %v1031
  %v1165 = vpop.f32.mrb[0].mxu0
  %v1166 = vadd.f32 %v1057, %v1165
  %v1167 = vpop.f32.mrb[0].mxu0
  %v1168 = vpop.f32.mrb[0].mxu0
  %v1169 = vadd.f32 %v1057, %v1168
  %v1170 = vpop.f32.mrb[0].mxu0
  %1171 = vmatprep.mubr.bf16.mxu0 0
  %1172 = vmatmul.mubr.bf16.gmra.mrb[0].mxu0 %v1032
  %v1173 = vpop.f32.mrb[0].mxu0
  %v1174 = vadd.f32 %v1057, %v1173
  %v1175 = vpop.f32.mrb[0].mxu0
  %v1176 = vpop.f32.mrb[0].mxu0
  %v1177 = vadd.f32 %v1057, %v1176
  %v1178 = vpop.f32.mrb[0].mxu0
  %1179 = vmatprep.mubr.bf16.mxu0 0
  %1180 = vmatmul.mubr.bf16.gmra.mrb[0].mxu0 %v1033
  %v1181 = vpop.f32.mrb[0].mxu0
  %v1182 = vadd.f32 %v1057, %v1181
  %v1183 = vpop.f32.mrb[0].mxu0
  %v1184 = vpop.f32.mrb[0].mxu0
  %v1185 = vadd.f32 %v1057, %v1184
  %v1186 = vpop.f32.mrb[0].mxu0
  %1187 = vmatprep.mubr.bf16.mxu0 0
  %1188 = vmatmul.mubr.bf16.gmra.mrb[0].mxu0 %v1034
  %v1189 = vpop.f32.mrb[0].mxu0
  %v1190 = vadd.f32 %v1057, %v1189
  %v1191 = vpop.f32.mrb[0].mxu0
  %v1192 = vpop.f32.mrb[0].mxu0
  %v1193 = vadd.f32 %v1057, %v1192
  %v1194 = vpop.f32.mrb[0].mxu0
  %1195 = vmatprep.mubr.bf16.mxu0 0
  %1196 = vmatmul.mubr.bf16.gmra.mrb[0].mxu0 %v1035
  %v1197 = vpop.f32.mrb[0].mxu0
  %v1198 = vadd.f32 %v1057, %v1197
  %v1199 = vpop.f32.mrb[0].mxu0
  %v1200 = vpop.f32.mrb[0].mxu0
  %v1201 = vadd.f32 %v1057, %v1200
  %v1202 = vpop.f32.mrb[0].mxu0
  %1203 = vdwg.mxu0
  %v1204 = vmax.f32 %v1142, 0.0
  %v1205 = vmax.f32 %v1145, 0.0
  %v1206 = vmax.f32 %v1150, 0.0
  %v1207 = vmax.f32 %v1153, 0.0
  %v1208 = vmax.f32 %v1158, 0.0
  %v1209 = vmax.f32 %v1161, 0.0
  %v1210 = vmax.f32 %v1166, 0.0
  %v1211 = vmax.f32 %v1169, 0.0
  %v1212 = vmax.f32 %v1174, 0.0
  %v1213 = vmax.f32 %v1177, 0.0
  %v1214 = vmax.f32 %v1182, 0.0
  %v1215 = vmax.f32 %v1185, 0.0
  %v1216 = vmax.f32 %v1190, 0.0
  %v1217 = vmax.f32 %v1193, 0.0
  %v1218 = vmax.f32 %v1198, 0.0
  %v1219 = vmax.f32 %v1201, 0.0
  %v1220 = vpack.c.bf16 %v1205, %v1204
  %v1221 = vpack.c.bf16 %v1207, %v1206
  %v1222 = vpack.c.bf16 %v1209, %v1208
  %v1223 = vpack.c.bf16 %v1211, %v1210
  %v1224 = vpack.c.bf16 %v1213, %v1212
  %v1225 = vpack.c.bf16 %v1215, %v1214
  %v1226 = vpack.c.bf16 %v1217, %v1216
  %v1227 = vpack.c.bf16 %v1219, %v1218
  %1228 = vmatprep.subr.bf16.mxu0 0
  %1229 = vmatpush1.bf16.msra.mxu0 %v1220
  %1230 = vmatprep.subr.bf16.mxu0 0
  %1231 = vmatpush1.bf16.msra.mxu0 %v1221
  %1232 = vmatprep.subr.bf16.mxu0 0
  %1233 = vmatpush1.bf16.msra.mxu0 %v1222
  %1234 = vmatprep.subr.bf16.mxu0 0
  %1235 = vmatpush1.bf16.msra.mxu0 %v1223
  %1236 = vmatprep.subr.bf16.mxu0 0
  %1237 = vmatpush1.bf16.msra.mxu0 %v1224
  %1238 = vmatprep.subr.bf16.mxu0 0
  %1239 = vmatpush1.bf16.msra.mxu0 %v1225
  %1240 = vmatprep.subr.bf16.mxu0 0
  %1241 = vmatpush1.bf16.msra.mxu0 %v1226
  %1242 = vmatprep.subr.bf16.mxu0 0
  %1243 = vmatpush1.bf16.msra.mxu0 %v1227
  %1244 = vmatprep.subr.bf16.mxu0 0
  %1245 = vmatpush1.bf16.msra.mxu0 0
  %1246 = vmatprep.subr.bf16.mxu0 0
  %1247 = vmatpush1.bf16.msra.mxu0 0
  %1248 = vmatprep.subr.bf16.mxu0 0
  %1249 = vmatpush1.bf16.msra.mxu0 0
  %1250 = vmatprep.subr.bf16.mxu0 0
  %1251 = vmatpush1.bf16.msra.mxu0 0
  %1252 = vmatprep.subr.bf16.mxu0 0
  %1253 = vmatpush1.bf16.msra.mxu0 0
  %1254 = vmatprep.subr.bf16.mxu0 0
  %1255 = vmatpush1.bf16.msra.mxu0 0
  %1256 = vmatprep.subr.bf16.mxu0 0
  %1257 = vmatpush1.bf16.msra.mxu0 0
  %1258 = vmatprep.subr.bf16.mxu0 0
  %1259 = vmatpush1.bf16.msra.mxu0 0
  %1260 = vmatprep.mubr.bf16.mxu0 0
  %1261 = vmatmul.mubr.bf16.gmra.mrb[0].mxu0 %v154
  %v1262 = vpop.f32.mrb[0].mxu0
  %v1263 = vadd.f32 0.0, %v1262
  %v1264 = vpop.f32.mrb[0].mxu0
  %v1265 = vpop.f32.mrb[0].mxu0
  %v1266 = vadd.f32 0.0, %v1265
  %v1267 = vpop.f32.mrb[0].mxu0
  %1268 = vmatprep.mubr.bf16.mxu0 0
  %1269 = vmatmul.mubr.bf16.gmra.mrb[0].mxu0 %v155
  %v1270 = vpop.f32.mrb[0].mxu0
  %v1271 = vadd.f32 0.0, %v1270
  %v1272 = vpop.f32.mrb[0].mxu0
  %v1273 = vpop.f32.mrb[0].mxu0
  %v1274 = vadd.f32 0.0, %v1273
  %v1275 = vpop.f32.mrb[0].mxu0
  %1276 = vmatprep.mubr.bf16.mxu0 0
  %1277 = vmatmul.mubr.bf16.gmra.mrb[0].mxu0 %v156
  %v1278 = vpop.f32.mrb[0].mxu0
  %v1279 = vadd.f32 0.0, %v1278
  %v1280 = vpop.f32.mrb[0].mxu0
  %v1281 = vpop.f32.mrb[0].mxu0
  %v1282 = vadd.f32 0.0, %v1281
  %v1283 = vpop.f32.mrb[0].mxu0
  %1284 = vmatprep.mubr.bf16.mxu0 0
  %1285 = vmatmul.mubr.bf16.gmra.mrb[0].mxu0 %v157
  %v1286 = vpop.f32.mrb[0].mxu0
  %v1287 = vadd.f32 0.0, %v1286
  %v1288 = vpop.f32.mrb[0].mxu0
  %v1289 = vpop.f32.mrb[0].mxu0
  %v1290 = vadd.f32 0.0, %v1289
  %v1291 = vpop.f32.mrb[0].mxu0
  %1292 = vmatprep.mubr.bf16.mxu0 0
  %1293 = vmatmul.mubr.bf16.gmra.mrb[0].mxu0 %v158
  %v1294 = vpop.f32.mrb[0].mxu0
  %v1295 = vadd.f32 0.0, %v1294
  %v1296 = vpop.f32.mrb[0].mxu0
  %v1297 = vpop.f32.mrb[0].mxu0
  %v1298 = vadd.f32 0.0, %v1297
  %v1299 = vpop.f32.mrb[0].mxu0
  %1300 = vmatprep.mubr.bf16.mxu0 0
  %1301 = vmatmul.mubr.bf16.gmra.mrb[0].mxu0 %v159
  %v1302 = vpop.f32.mrb[0].mxu0
  %v1303 = vadd.f32 0.0, %v1302
  %v1304 = vpop.f32.mrb[0].mxu0
  %v1305 = vpop.f32.mrb[0].mxu0
  %v1306 = vadd.f32 0.0, %v1305
  %v1307 = vpop.f32.mrb[0].mxu0
  %1308 = vmatprep.mubr.bf16.mxu0 0
  %1309 = vmatmul.mubr.bf16.gmra.mrb[0].mxu0 %v160
  %v1310 = vpop.f32.mrb[0].mxu0
  %v1311 = vadd.f32 0.0, %v1310
  %v1312 = vpop.f32.mrb[0].mxu0
  %v1313 = vpop.f32.mrb[0].mxu0
  %v1314 = vadd.f32 0.0, %v1313
  %v1315 = vpop.f32.mrb[0].mxu0
  %1316 = vmatprep.mubr.bf16.mxu0 0
  %1317 = vmatmul.mubr.bf16.gmra.mrb[0].mxu0 %v161
  %v1318 = vpop.f32.mrb[0].mxu0
  %v1319 = vadd.f32 0.0, %v1318
  %v1320 = vpop.f32.mrb[0].mxu0
  %v1321 = vpop.f32.mrb[0].mxu0
  %v1322 = vadd.f32 0.0, %v1321
  %v1323 = vpop.f32.mrb[0].mxu0
  %1324 = vdwg.mxu0
  %v1325 = vadd.f32 %v1204, %v1263
  %v1326 = vadd.f32 %v1205, %v1266
  %v1327 = vadd.f32 %v1206, %v1271
  %v1328 = vadd.f32 %v1207, %v1274
  %v1329 = vadd.f32 %v1208, %v1279
  %v1330 = vadd.f32 %v1209, %v1282
  %v1331 = vadd.f32 %v1210, %v1287
  %v1332 = vadd.f32 %v1211, %v1290
  %v1333 = vadd.f32 %v1212, %v1295
  %v1334 = vadd.f32 %v1213, %v1298
  %v1335 = vadd.f32 %v1214, %v1303
  %v1336 = vadd.f32 %v1215, %v1306
  %v1337 = vadd.f32 %v1216, %v1311
  %v1338 = vadd.f32 %v1217, %v1314
  %v1339 = vadd.f32 %v1218, %v1319
  %v1340 = vadd.f32 %v1219, %v1322
  %v1341 = vpack.c.bf16 %v1326, %v1325
  %v1342 = vpack.c.bf16 %v1328, %v1327
  %v1343 = vpack.c.bf16 %v1330, %v1329
  %v1344 = vpack.c.bf16 %v1332, %v1331
  %v1345 = vpack.c.bf16 %v1334, %v1333
  %v1346 = vpack.c.bf16 %v1336, %v1335
  %v1347 = vpack.c.bf16 %v1338, %v1337
  %v1348 = vpack.c.bf16 %v1340, %v1339
  %v1349 = vld [vmem:[%s12] sm:$0xf]
  %v1350 = vld [vmem:[%s12 + $0x4] sm:$0xf]
  %v1351 = vld [vmem:[%s12 + $0x8] sm:$0xf]
  %v1352 = vld [vmem:[%s12 + $0xc] sm:$0xf]
  %v1353 = vld [vmem:[%s12 + $0x10] sm:$0xf]
  %v1354 = vld [vmem:[%s12 + $0x14] sm:$0xf]
  %v1355 = vld [vmem:[%s12 + $0x18] sm:$0xf]
  %v1356 = vld [vmem:[%s12 + $0x1c] sm:$0xf]
  %v1357 = vld [vmem:[%s12 + $0x20] sm:$0xf]
  %v1358 = vld [vmem:[%s12 + $0x24] sm:$0xf]
  %v1359 = vld [vmem:[%s12 + $0x28] sm:$0xf]
  %v1360 = vld [vmem:[%s12 + $0x2c] sm:$0xf]
  %v1361 = vld [vmem:[%s12 + $0x30] sm:$0xf]
  %v1362 = vld [vmem:[%s12 + $0x34] sm:$0xf]
  %v1363 = vld [vmem:[%s12 + $0x38] sm:$0xf]
  %v1364 = vld [vmem:[%s12 + $0x3c] sm:$0xf]
  %v1365 = vld [vmem:[%s13] sm:$0x1]
  %v1367 = vlaneseq
  %v1368 = vshrl.u32 %v1367, 7
  %v1369 = vsub.s32 0, %v1368
  %v1370 = vrot.slane %v1365, %v1369
  %v1388 = vunpack.c.l.b16 %v1349
  %v1389 = vunpack.c.l.b16 %v1350
  %v1390 = vunpack.c.l.b16 %v1351
  %v1391 = vunpack.c.l.b16 %v1352
  %v1392 = vunpack.c.l.b16 %v1353
  %v1393 = vunpack.c.l.b16 %v1354
  %v1394 = vunpack.c.l.b16 %v1355
  %v1395 = vunpack.c.l.b16 %v1356
  %v1396 = vunpack.c.l.b16 %v1357
  %v1397 = vunpack.c.l.b16 %v1358
  %v1398 = vunpack.c.l.b16 %v1359
  %v1399 = vunpack.c.l.b16 %v1360
  %v1400 = vunpack.c.l.b16 %v1361
  %v1401 = vunpack.c.l.b16 %v1362
  %v1402 = vunpack.c.l.b16 %v1363
  %v1403 = vunpack.c.l.b16 %v1364
  %v1404 = vpack.c.b16 %v1389, %v1388
  %v1405 = vpack.c.b16 %v1391, %v1390
  %v1406 = vpack.c.b16 %v1393, %v1392
  %v1407 = vpack.c.b16 %v1395, %v1394
  %v1408 = vpack.c.b16 %v1397, %v1396
  %v1409 = vpack.c.b16 %v1399, %v1398
  %v1410 = vpack.c.b16 %v1401, %v1400
  %v1411 = vpack.c.b16 %v1403, %v1402
  %1420 = vmatprep.subr.bf16.mxu0 0
  %1421 = vmatpush1.bf16.msra.mxu0 %v1404
  %1422 = vmatprep.subr.bf16.mxu0 0
  %1423 = vmatpush1.bf16.msra.mxu0 %v1405
  %1424 = vmatprep.subr.bf16.mxu0 0
  %1425 = vmatpush1.bf16.msra.mxu0 %v1406
  %1426 = vmatprep.subr.bf16.mxu0 0
  %1427 = vmatpush1.bf16.msra.mxu0 %v1407
  %1428 = vmatprep.subr.bf16.mxu0 0
  %1429 = vmatpush1.bf16.msra.mxu0 %v1408
  %1430 = vmatprep.subr.bf16.mxu0 0
  %1431 = vmatpush1.bf16.msra.mxu0 %v1409
  %1432 = vmatprep.subr.bf16.mxu0 0
  %1433 = vmatpush1.bf16.msra.mxu0 %v1410
  %1434 = vmatprep.subr.bf16.mxu0 0
  %1435 = vmatpush1.bf16.msra.mxu0 %v1411
  %1436 = vmatprep.subr.bf16.mxu0 0
  %1437 = vmatpush1.bf16.msra.mxu0 0
  %1438 = vmatprep.subr.bf16.mxu0 0
  %1439 = vmatpush1.bf16.msra.mxu0 0
  %1440 = vmatprep.subr.bf16.mxu0 0
  %1441 = vmatpush1.bf16.msra.mxu0 0
  %1442 = vmatprep.subr.bf16.mxu0 0
  %1443 = vmatpush1.bf16.msra.mxu0 0
  %1444 = vmatprep.subr.bf16.mxu0 0
  %1445 = vmatpush1.bf16.msra.mxu0 0
  %1446 = vmatprep.subr.bf16.mxu0 0
  %1447 = vmatpush1.bf16.msra.mxu0 0
  %1448 = vmatprep.subr.bf16.mxu0 0
  %1449 = vmatpush1.bf16.msra.mxu0 0
  %1450 = vmatprep.subr.bf16.mxu0 0
  %1451 = vmatpush1.bf16.msra.mxu0 0
  %1452 = vmatprep.mubr.bf16.mxu0 0
  %1453 = vmatmul.mubr.bf16.gmra.mrb[0].mxu0 %v1341
  %v1454 = vpop.f32.mrb[0].mxu0
  %v1455 = vadd.f32 %v1370, %v1454
  %v1456 = vpop.f32.mrb[0].mxu0
  %v1457 = vpop.f32.mrb[0].mxu0
  %v1458 = vadd.f32 %v1370, %v1457
  %v1459 = vpop.f32.mrb[0].mxu0
  %1460 = vmatprep.mubr.bf16.mxu0 0
  %1461 = vmatmul.mubr.bf16.gmra.mrb[0].mxu0 %v1342
  %v1462 = vpop.f32.mrb[0].mxu0
  %v1463 = vadd.f32 %v1370, %v1462
  %v1464 = vpop.f32.mrb[0].mxu0
  %v1465 = vpop.f32.mrb[0].mxu0
  %v1466 = vadd.f32 %v1370, %v1465
  %v1467 = vpop.f32.mrb[0].mxu0
  %1468 = vmatprep.mubr.bf16.mxu0 0
  %1469 = vmatmul.mubr.bf16.gmra.mrb[0].mxu0 %v1343
  %v1470 = vpop.f32.mrb[0].mxu0
  %v1471 = vadd.f32 %v1370, %v1470
  %v1472 = vpop.f32.mrb[0].mxu0
  %v1473 = vpop.f32.mrb[0].mxu0
  %v1474 = vadd.f32 %v1370, %v1473
  %v1475 = vpop.f32.mrb[0].mxu0
  %1476 = vmatprep.mubr.bf16.mxu0 0
  %1477 = vmatmul.mubr.bf16.gmra.mrb[0].mxu0 %v1344
  %v1478 = vpop.f32.mrb[0].mxu0
  %v1479 = vadd.f32 %v1370, %v1478
  %v1480 = vpop.f32.mrb[0].mxu0
  %v1481 = vpop.f32.mrb[0].mxu0
  %v1482 = vadd.f32 %v1370, %v1481
  %v1483 = vpop.f32.mrb[0].mxu0
  %1484 = vmatprep.mubr.bf16.mxu0 0
  %1485 = vmatmul.mubr.bf16.gmra.mrb[0].mxu0 %v1345
  %v1486 = vpop.f32.mrb[0].mxu0
  %v1487 = vadd.f32 %v1370, %v1486
  %v1488 = vpop.f32.mrb[0].mxu0
  %v1489 = vpop.f32.mrb[0].mxu0
  %v1490 = vadd.f32 %v1370, %v1489
  %v1491 = vpop.f32.mrb[0].mxu0
  %1492 = vmatprep.mubr.bf16.mxu0 0
  %1493 = vmatmul.mubr.bf16.gmra.mrb[0].mxu0 %v1346
  %v1494 = vpop.f32.mrb[0].mxu0
  %v1495 = vadd.f32 %v1370, %v1494
  %v1496 = vpop.f32.mrb[0].mxu0
  %v1497 = vpop.f32.mrb[0].mxu0
  %v1498 = vadd.f32 %v1370, %v1497
  %v1499 = vpop.f32.mrb[0].mxu0
  %1500 = vmatprep.mubr.bf16.mxu0 0
  %1501 = vmatmul.mubr.bf16.gmra.mrb[0].mxu0 %v1347
  %v1502 = vpop.f32.mrb[0].mxu0
  %v1503 = vadd.f32 %v1370, %v1502
  %v1504 = vpop.f32.mrb[0].mxu0
  %v1505 = vpop.f32.mrb[0].mxu0
  %v1506 = vadd.f32 %v1370, %v1505
  %v1507 = vpop.f32.mrb[0].mxu0
  %1508 = vmatprep.mubr.bf16.mxu0 0
  %1509 = vmatmul.mubr.bf16.gmra.mrb[0].mxu0 %v1348
  %v1510 = vpop.f32.mrb[0].mxu0
  %v1511 = vadd.f32 %v1370, %v1510
  %v1512 = vpop.f32.mrb[0].mxu0
  %v1513 = vpop.f32.mrb[0].mxu0
  %v1514 = vadd.f32 %v1370, %v1513
  %v1515 = vpop.f32.mrb[0].mxu0
  %1516 = vdwg.mxu0
  %v1517 = vmax.f32 %v1455, 0.0
  %v1518 = vmax.f32 %v1458, 0.0
  %v1519 = vmax.f32 %v1463, 0.0
  %v1520 = vmax.f32 %v1466, 0.0
  %v1521 = vmax.f32 %v1471, 0.0
  %v1522 = vmax.f32 %v1474, 0.0
  %v1523 = vmax.f32 %v1479, 0.0
  %v1524 = vmax.f32 %v1482, 0.0
  %v1525 = vmax.f32 %v1487, 0.0
  %v1526 = vmax.f32 %v1490, 0.0
  %v1527 = vmax.f32 %v1495, 0.0
  %v1528 = vmax.f32 %v1498, 0.0
  %v1529 = vmax.f32 %v1503, 0.0
  %v1530 = vmax.f32 %v1506, 0.0
  %v1531 = vmax.f32 %v1511, 0.0
  %v1532 = vmax.f32 %v1514, 0.0
  %v1533 = vpack.c.bf16 %v1518, %v1517
  %v1534 = vpack.c.bf16 %v1520, %v1519
  %v1535 = vpack.c.bf16 %v1522, %v1521
  %v1536 = vpack.c.bf16 %v1524, %v1523
  %v1537 = vpack.c.bf16 %v1526, %v1525
  %v1538 = vpack.c.bf16 %v1528, %v1527
  %v1539 = vpack.c.bf16 %v1530, %v1529
  %v1540 = vpack.c.bf16 %v1532, %v1531
  %v1541 = vld [vmem:[%s14] sm:$0xf]
  %v1542 = vld [vmem:[%s14 + $0x4] sm:$0xf]
  %v1543 = vld [vmem:[%s14 + $0x8] sm:$0xf]
  %v1544 = vld [vmem:[%s14 + $0xc] sm:$0xf]
  %v1545 = vld [vmem:[%s14 + $0x10] sm:$0xf]
  %v1546 = vld [vmem:[%s14 + $0x14] sm:$0xf]
  %v1547 = vld [vmem:[%s14 + $0x18] sm:$0xf]
  %v1548 = vld [vmem:[%s14 + $0x1c] sm:$0xf]
  %v1549 = vld [vmem:[%s14 + $0x20] sm:$0xf]
  %v1550 = vld [vmem:[%s14 + $0x24] sm:$0xf]
  %v1551 = vld [vmem:[%s14 + $0x28] sm:$0xf]
  %v1552 = vld [vmem:[%s14 + $0x2c] sm:$0xf]
  %v1553 = vld [vmem:[%s14 + $0x30] sm:$0xf]
  %v1554 = vld [vmem:[%s14 + $0x34] sm:$0xf]
  %v1555 = vld [vmem:[%s14 + $0x38] sm:$0xf]
  %v1556 = vld [vmem:[%s14 + $0x3c] sm:$0xf]
  %v1557 = vld [vmem:[%s15] sm:$0x1]
  %v1559 = vlaneseq
  %v1560 = vshrl.u32 %v1559, 7
  %v1561 = vsub.s32 0, %v1560
  %v1562 = vrot.slane %v1557, %v1561
  %v1580 = vunpack.c.l.b16 %v1541
  %v1581 = vunpack.c.l.b16 %v1542
  %v1582 = vunpack.c.l.b16 %v1543
  %v1583 = vunpack.c.l.b16 %v1544
  %v1584 = vunpack.c.l.b16 %v1545
  %v1585 = vunpack.c.l.b16 %v1546
  %v1586 = vunpack.c.l.b16 %v1547
  %v1587 = vunpack.c.l.b16 %v1548
  %v1588 = vunpack.c.l.b16 %v1549
  %v1589 = vunpack.c.l.b16 %v1550
  %v1590 = vunpack.c.l.b16 %v1551
  %v1591 = vunpack.c.l.b16 %v1552
  %v1592 = vunpack.c.l.b16 %v1553
  %v1593 = vunpack.c.l.b16 %v1554
  %v1594 = vunpack.c.l.b16 %v1555
  %v1595 = vunpack.c.l.b16 %v1556
  %v1596 = vpack.c.b16 %v1581, %v1580
  %v1597 = vpack.c.b16 %v1583, %v1582
  %v1598 = vpack.c.b16 %v1585, %v1584
  %v1599 = vpack.c.b16 %v1587, %v1586
  %v1600 = vpack.c.b16 %v1589, %v1588
  %v1601 = vpack.c.b16 %v1591, %v1590
  %v1602 = vpack.c.b16 %v1593, %v1592
  %v1603 = vpack.c.b16 %v1595, %v1594
  %1612 = vmatprep.subr.bf16.mxu0 0
  %1613 = vmatpush1.bf16.msra.mxu0 %v1596
  %1614 = vmatprep.subr.bf16.mxu0 0
  %1615 = vmatpush1.bf16.msra.mxu0 %v1597
  %1616 = vmatprep.subr.bf16.mxu0 0
  %1617 = vmatpush1.bf16.msra.mxu0 %v1598
  %1618 = vmatprep.subr.bf16.mxu0 0
  %1619 = vmatpush1.bf16.msra.mxu0 %v1599
  %1620 = vmatprep.subr.bf16.mxu0 0
  %1621 = vmatpush1.bf16.msra.mxu0 %v1600
  %1622 = vmatprep.subr.bf16.mxu0 0
  %1623 = vmatpush1.bf16.msra.mxu0 %v1601
  %1624 = vmatprep.subr.bf16.mxu0 0
  %1625 = vmatpush1.bf16.msra.mxu0 %v1602
  %1626 = vmatprep.subr.bf16.mxu0 0
  %1627 = vmatpush1.bf16.msra.mxu0 %v1603
  %1628 = vmatprep.subr.bf16.mxu0 0
  %1629 = vmatpush1.bf16.msra.mxu0 0
  %1630 = vmatprep.subr.bf16.mxu0 0
  %1631 = vmatpush1.bf16.msra.mxu0 0
  %1632 = vmatprep.subr.bf16.mxu0 0
  %1633 = vmatpush1.bf16.msra.mxu0 0
  %1634 = vmatprep.subr.bf16.mxu0 0
  %1635 = vmatpush1.bf16.msra.mxu0 0
  %1636 = vmatprep.subr.bf16.mxu0 0
  %1637 = vmatpush1.bf16.msra.mxu0 0
  %1638 = vmatprep.subr.bf16.mxu0 0
  %1639 = vmatpush1.bf16.msra.mxu0 0
  %1640 = vmatprep.subr.bf16.mxu0 0
  %1641 = vmatpush1.bf16.msra.mxu0 0
  %1642 = vmatprep.subr.bf16.mxu0 0
  %1643 = vmatpush1.bf16.msra.mxu0 0
  %1644 = vmatprep.mubr.bf16.mxu0 0
  %1645 = vmatmul.mubr.bf16.gmra.mrb[0].mxu0 %v1533
  %v1646 = vpop.f32.mrb[0].mxu0
  %v1647 = vadd.f32 %v1562, %v1646
  %v1648 = vpop.f32.mrb[0].mxu0
  %v1649 = vpop.f32.mrb[0].mxu0
  %v1650 = vadd.f32 %v1562, %v1649
  %v1651 = vpop.f32.mrb[0].mxu0
  %1652 = vmatprep.mubr.bf16.mxu0 0
  %1653 = vmatmul.mubr.bf16.gmra.mrb[0].mxu0 %v1534
  %v1654 = vpop.f32.mrb[0].mxu0
  %v1655 = vadd.f32 %v1562, %v1654
  %v1656 = vpop.f32.mrb[0].mxu0
  %v1657 = vpop.f32.mrb[0].mxu0
  %v1658 = vadd.f32 %v1562, %v1657
  %v1659 = vpop.f32.mrb[0].mxu0
  %1660 = vmatprep.mubr.bf16.mxu0 0
  %1661 = vmatmul.mubr.bf16.gmra.mrb[0].mxu0 %v1535
  %v1662 = vpop.f32.mrb[0].mxu0
  %v1663 = vadd.f32 %v1562, %v1662
  %v1664 = vpop.f32.mrb[0].mxu0
  %v1665 = vpop.f32.mrb[0].mxu0
  %v1666 = vadd.f32 %v1562, %v1665
  %v1667 = vpop.f32.mrb[0].mxu0
  %1668 = vmatprep.mubr.bf16.mxu0 0
  %1669 = vmatmul.mubr.bf16.gmra.mrb[0].mxu0 %v1536
  %v1670 = vpop.f32.mrb[0].mxu0
  %v1671 = vadd.f32 %v1562, %v1670
  %v1672 = vpop.f32.mrb[0].mxu0
  %v1673 = vpop.f32.mrb[0].mxu0
  %v1674 = vadd.f32 %v1562, %v1673
  %v1675 = vpop.f32.mrb[0].mxu0
  %1676 = vmatprep.mubr.bf16.mxu0 0
  %1677 = vmatmul.mubr.bf16.gmra.mrb[0].mxu0 %v1537
  %v1678 = vpop.f32.mrb[0].mxu0
  %v1679 = vadd.f32 %v1562, %v1678
  %v1680 = vpop.f32.mrb[0].mxu0
  %v1681 = vpop.f32.mrb[0].mxu0
  %v1682 = vadd.f32 %v1562, %v1681
  %v1683 = vpop.f32.mrb[0].mxu0
  %1684 = vmatprep.mubr.bf16.mxu0 0
  %1685 = vmatmul.mubr.bf16.gmra.mrb[0].mxu0 %v1538
  %v1686 = vpop.f32.mrb[0].mxu0
  %v1687 = vadd.f32 %v1562, %v1686
  %v1688 = vpop.f32.mrb[0].mxu0
  %v1689 = vpop.f32.mrb[0].mxu0
  %v1690 = vadd.f32 %v1562, %v1689
  %v1691 = vpop.f32.mrb[0].mxu0
  %1692 = vmatprep.mubr.bf16.mxu0 0
  %1693 = vmatmul.mubr.bf16.gmra.mrb[0].mxu0 %v1539
  %v1694 = vpop.f32.mrb[0].mxu0
  %v1695 = vadd.f32 %v1562, %v1694
  %v1696 = vpop.f32.mrb[0].mxu0
  %v1697 = vpop.f32.mrb[0].mxu0
  %v1698 = vadd.f32 %v1562, %v1697
  %v1699 = vpop.f32.mrb[0].mxu0
  %1700 = vmatprep.mubr.bf16.mxu0 0
  %1701 = vmatmul.mubr.bf16.gmra.mrb[0].mxu0 %v1540
  %v1702 = vpop.f32.mrb[0].mxu0
  %v1703 = vadd.f32 %v1562, %v1702
  %v1704 = vpop.f32.mrb[0].mxu0
  %v1705 = vpop.f32.mrb[0].mxu0
  %v1706 = vadd.f32 %v1562, %v1705
  %v1707 = vpop.f32.mrb[0].mxu0
  %1708 = vdwg.mxu0
  %v1709 = vmax.f32 %v1647, 0.0
  %v1710 = vmax.f32 %v1650, 0.0
  %v1711 = vmax.f32 %v1655, 0.0
  %v1712 = vmax.f32 %v1658, 0.0
  %v1713 = vmax.f32 %v1663, 0.0
  %v1714 = vmax.f32 %v1666, 0.0
  %v1715 = vmax.f32 %v1671, 0.0
  %v1716 = vmax.f32 %v1674, 0.0
  %v1717 = vmax.f32 %v1679, 0.0
  %v1718 = vmax.f32 %v1682, 0.0
  %v1719 = vmax.f32 %v1687, 0.0
  %v1720 = vmax.f32 %v1690, 0.0
  %v1721 = vmax.f32 %v1695, 0.0
  %v1722 = vmax.f32 %v1698, 0.0
  %v1723 = vmax.f32 %v1703, 0.0
  %v1724 = vmax.f32 %v1706, 0.0
  %v1725 = vpack.c.bf16 %v1710, %v1709
  %v1726 = vpack.c.bf16 %v1712, %v1711
  %v1727 = vpack.c.bf16 %v1714, %v1713
  %v1728 = vpack.c.bf16 %v1716, %v1715
  %v1729 = vpack.c.bf16 %v1718, %v1717
  %v1730 = vpack.c.bf16 %v1720, %v1719
  %v1731 = vpack.c.bf16 %v1722, %v1721
  %v1732 = vpack.c.bf16 %v1724, %v1723
  %v1733 = vld [vmem:[%s2] sm:$0xf]
  %v1734 = vld [vmem:[%s3] sm:$0xff]
  %1735 = vmatprep.subr.bf16.mxu0 0
  %1736 = vmatpush1.bf16.msra.mxu0 %v715
  %1737 = vmatprep.subr.bf16.mxu0 0
  %1738 = vmatpush1.bf16.msra.mxu0 %v716
  %1739 = vmatprep.subr.bf16.mxu0 0
  %1740 = vmatpush1.bf16.msra.mxu0 %v717
  %1741 = vmatprep.subr.bf16.mxu0 0
  %1742 = vmatpush1.bf16.msra.mxu0 %v718
  %1743 = vmatprep.subr.bf16.mxu0 0
  %1744 = vmatpush1.bf16.msra.mxu0 %v719
  %1745 = vmatprep.subr.bf16.mxu0 0
  %1746 = vmatpush1.bf16.msra.mxu0 %v720
  %1747 = vmatprep.subr.bf16.mxu0 0
  %1748 = vmatpush1.bf16.msra.mxu0 %v721
  %1749 = vmatprep.subr.bf16.mxu0 0
  %1750 = vmatpush1.bf16.msra.mxu0 %v722
  %1751 = vmatprep.subr.bf16.mxu0 0
  %1752 = vmatpush1.bf16.msra.mxu0 0
  %1753 = vmatprep.subr.bf16.mxu0 0
  %1754 = vmatpush1.bf16.msra.mxu0 0
  %1755 = vmatprep.subr.bf16.mxu0 0
  %1756 = vmatpush1.bf16.msra.mxu0 0
  %1757 = vmatprep.subr.bf16.mxu0 0
  %1758 = vmatpush1.bf16.msra.mxu0 0
  %1759 = vmatprep.subr.bf16.mxu0 0
  %1760 = vmatpush1.bf16.msra.mxu0 0
  %1761 = vmatprep.subr.bf16.mxu0 0
  %1762 = vmatpush1.bf16.msra.mxu0 0
  %1763 = vmatprep.subr.bf16.mxu0 0
  %1764 = vmatpush1.bf16.msra.mxu0 0
  %1765 = vmatprep.subr.bf16.mxu0 0
  %1766 = vmatpush1.bf16.msra.mxu0 0
  %1767 = vmatprep.mubr.bf16.mxu0 0
  %1768 = vmatmul.mubr.bf16.gmra.mrb[0].mxu0 %v1733
  %v1769 = vpop.f32.mrb[0].mxu0
  %v1770 = vadd.f32 0.0, %v1769
  %v1771 = vpop.f32.mrb[0].mxu0
  %v1772 = vpop.f32.mrb[0].mxu0
  %v1773 = vpop.f32.mrb[0].mxu0
  %1774 = vdwg.mxu0
  %1776 = vset.pattern.permute.xlu0 0
  %1777 = vperm.xlu0 %1776, %v1734
  %v1778 = vpop.permute.xlu0 %1777
  %v1780 = vmul.f32 %v1770, %v1778
  %v1781 = vpack.c.bf16 %v1780, %v1780
  %1782 = vmatprep.subr.bf16.mxu0 0
  %1783 = vmatpush1.bf16.msra.mxu0 %v1220
  %1784 = vmatprep.subr.bf16.mxu0 0
  %1785 = vmatpush1.bf16.msra.mxu0 %v1221
  %1786 = vmatprep.subr.bf16.mxu0 0
  %1787 = vmatpush1.bf16.msra.mxu0 %v1222
  %1788 = vmatprep.subr.bf16.mxu0 0
  %1789 = vmatpush1.bf16.msra.mxu0 %v1223
  %1790 = vmatprep.subr.bf16.mxu0 0
  %1791 = vmatpush1.bf16.msra.mxu0 %v1224
  %1792 = vmatprep.subr.bf16.mxu0 0
  %1793 = vmatpush1.bf16.msra.mxu0 %v1225
  %1794 = vmatprep.subr.bf16.mxu0 0
  %1795 = vmatpush1.bf16.msra.mxu0 %v1226
  %1796 = vmatprep.subr.bf16.mxu0 0
  %1797 = vmatpush1.bf16.msra.mxu0 %v1227
  %1798 = vmatprep.subr.bf16.mxu0 0
  %1799 = vmatpush1.bf16.msra.mxu0 0
  %1800 = vmatprep.subr.bf16.mxu0 0
  %1801 = vmatpush1.bf16.msra.mxu0 0
  %1802 = vmatprep.subr.bf16.mxu0 0
  %1803 = vmatpush1.bf16.msra.mxu0 0
  %1804 = vmatprep.subr.bf16.mxu0 0
  %1805 = vmatpush1.bf16.msra.mxu0 0
  %1806 = vmatprep.subr.bf16.mxu0 0
  %1807 = vmatpush1.bf16.msra.mxu0 0
  %1808 = vmatprep.subr.bf16.mxu0 0
  %1809 = vmatpush1.bf16.msra.mxu0 0
  %1810 = vmatprep.subr.bf16.mxu0 0
  %1811 = vmatpush1.bf16.msra.mxu0 0
  %1812 = vmatprep.subr.bf16.mxu0 0
  %1813 = vmatpush1.bf16.msra.mxu0 0
  %1814 = vmatprep.mubr.bf16.mxu0 0
  %1815 = vmatmul.mubr.bf16.gmra.mrb[0].mxu0 %v1733
  %v1816 = vpop.f32.mrb[0].mxu0
  %v1817 = vadd.f32 0.0, %v1816
  %v1818 = vpop.f32.mrb[0].mxu0
  %v1819 = vpop.f32.mrb[0].mxu0
  %v1820 = vpop.f32.mrb[0].mxu0
  %1821 = vdwg.mxu0
  %v1822 = vmul.f32 %v1817, %v1778
  %v1823 = vpack.c.bf16 %v1822, %v1822
  %1824 = vmatprep.subr.bf16.mxu0 0
  %1825 = vmatpush1.bf16.msra.mxu0 %v1725
  %1826 = vmatprep.subr.bf16.mxu0 0
  %1827 = vmatpush1.bf16.msra.mxu0 %v1726
  %1828 = vmatprep.subr.bf16.mxu0 0
  %1829 = vmatpush1.bf16.msra.mxu0 %v1727
  %1830 = vmatprep.subr.bf16.mxu0 0
  %1831 = vmatpush1.bf16.msra.mxu0 %v1728
  %1832 = vmatprep.subr.bf16.mxu0 0
  %1833 = vmatpush1.bf16.msra.mxu0 %v1729
  %1834 = vmatprep.subr.bf16.mxu0 0
  %1835 = vmatpush1.bf16.msra.mxu0 %v1730
  %1836 = vmatprep.subr.bf16.mxu0 0
  %1837 = vmatpush1.bf16.msra.mxu0 %v1731
  %1838 = vmatprep.subr.bf16.mxu0 0
  %1839 = vmatpush1.bf16.msra.mxu0 %v1732
  %1840 = vmatprep.subr.bf16.mxu0 0
  %1841 = vmatpush1.bf16.msra.mxu0 0
  %1842 = vmatprep.subr.bf16.mxu0 0
  %1843 = vmatpush1.bf16.msra.mxu0 0
  %1844 = vmatprep.subr.bf16.mxu0 0
  %1845 = vmatpush1.bf16.msra.mxu0 0
  %1846 = vmatprep.subr.bf16.mxu0 0
  %1847 = vmatpush1.bf16.msra.mxu0 0
  %1848 = vmatprep.subr.bf16.mxu0 0
  %1849 = vmatpush1.bf16.msra.mxu0 0
  %1850 = vmatprep.subr.bf16.mxu0 0
  %1851 = vmatpush1.bf16.msra.mxu0 0
  %1852 = vmatprep.subr.bf16.mxu0 0
  %1853 = vmatpush1.bf16.msra.mxu0 0
  %1854 = vmatprep.subr.bf16.mxu0 0
  %1855 = vmatpush1.bf16.msra.mxu0 0
  %1856 = vmatprep.mubr.bf16.mxu0 0
  %1857 = vmatmul.mubr.bf16.gmra.mrb[0].mxu0 %v1733
  %v1858 = vpop.f32.mrb[0].mxu0
  %v1859 = vadd.f32 0.0, %v1858
  %v1860 = vpop.f32.mrb[0].mxu0
  %v1861 = vpop.f32.mrb[0].mxu0
  %v1862 = vpop.f32.mrb[0].mxu0
  %1863 = vdwg.mxu0
  %v1864 = vmul.f32 %v1859, %v1778
  %v1865 = vpack.c.bf16 %v1864, %v1864
  %v1866 = vld [vmem:[%s16] sm:$0xf]
  %v1867 = vld [vmem:[%s16 + $0x4] sm:$0xf]
  %v1868 = vld [vmem:[%s16 + $0x8] sm:$0xf]
  %v1869 = vld [vmem:[%s16 + $0xc] sm:$0xf]
  %v1870 = vld [vmem:[%s16 + $0x10] sm:$0xf]
  %v1871 = vld [vmem:[%s16 + $0x14] sm:$0xf]
  %v1872 = vld [vmem:[%s16 + $0x18] sm:$0xf]
  %v1873 = vld [vmem:[%s16 + $0x1c] sm:$0xf]
  %v1874 = vld [vmem:[%s16 + $0x20] sm:$0xf]
  %v1875 = vld [vmem:[%s16 + $0x24] sm:$0xf]
  %v1876 = vld [vmem:[%s16 + $0x28] sm:$0xf]
  %v1877 = vld [vmem:[%s16 + $0x2c] sm:$0xf]
  %v1878 = vld [vmem:[%s16 + $0x30] sm:$0xf]
  %v1879 = vld [vmem:[%s16 + $0x34] sm:$0xf]
  %v1880 = vld [vmem:[%s16 + $0x38] sm:$0xf]
  %v1881 = vld [vmem:[%s16 + $0x3c] sm:$0xf]
  %v1882 = vld [vmem:[%s17] sm:$0xf]
  %v1883 = vld [vmem:[%s17 + $0x4] sm:$0xf]
  %v1884 = vld [vmem:[%s17 + $0x8] sm:$0xf]
  %v1885 = vld [vmem:[%s17 + $0xc] sm:$0xf]
  %v1886 = vld [vmem:[%s17 + $0x10] sm:$0xf]
  %v1887 = vld [vmem:[%s17 + $0x14] sm:$0xf]
  %v1888 = vld [vmem:[%s17 + $0x18] sm:$0xf]
  %v1889 = vld [vmem:[%s17 + $0x1c] sm:$0xf]
  %v1890 = vld [vmem:[%s17 + $0x20] sm:$0xf]
  %v1891 = vld [vmem:[%s17 + $0x24] sm:$0xf]
  %v1892 = vld [vmem:[%s17 + $0x28] sm:$0xf]
  %v1893 = vld [vmem:[%s17 + $0x2c] sm:$0xf]
  %v1894 = vld [vmem:[%s17 + $0x30] sm:$0xf]
  %v1895 = vld [vmem:[%s17 + $0x34] sm:$0xf]
  %v1896 = vld [vmem:[%s17 + $0x38] sm:$0xf]
  %v1897 = vld [vmem:[%s17 + $0x3c] sm:$0xf]
  %v1914 = vunpack.c.l.b16 %v1882
  %v1915 = vunpack.c.l.b16 %v1883
  %v1916 = vunpack.c.l.b16 %v1884
  %v1917 = vunpack.c.l.b16 %v1885
  %v1918 = vunpack.c.l.b16 %v1886
  %v1919 = vunpack.c.l.b16 %v1887
  %v1920 = vunpack.c.l.b16 %v1888
  %v1921 = vunpack.c.l.b16 %v1889
  %v1922 = vunpack.c.l.b16 %v1890
  %v1923 = vunpack.c.l.b16 %v1891
  %v1924 = vunpack.c.l.b16 %v1892
  %v1925 = vunpack.c.l.b16 %v1893
  %v1926 = vunpack.c.l.b16 %v1894
  %v1927 = vunpack.c.l.b16 %v1895
  %v1928 = vunpack.c.l.b16 %v1896
  %v1929 = vunpack.c.l.b16 %v1897
  %v1930 = vpack.c.b16 %v1915, %v1914
  %v1931 = vpack.c.b16 %v1917, %v1916
  %v1932 = vpack.c.b16 %v1919, %v1918
  %v1933 = vpack.c.b16 %v1921, %v1920
  %v1934 = vpack.c.b16 %v1923, %v1922
  %v1935 = vpack.c.b16 %v1925, %v1924
  %v1936 = vpack.c.b16 %v1927, %v1926
  %v1937 = vpack.c.b16 %v1929, %v1928
  %1946 = vmatprep.subr.bf16.mxu0 0
  %1947 = vmatpush1.bf16.msra.mxu0 %v1930
  %1948 = vmatprep.subr.bf16.mxu0 0
  %1949 = vmatpush1.bf16.msra.mxu0 %v1931
  %1950 = vmatprep.subr.bf16.mxu0 0
  %1951 = vmatpush1.bf16.msra.mxu0 %v1932
  %1952 = vmatprep.subr.bf16.mxu0 0
  %1953 = vmatpush1.bf16.msra.mxu0 %v1933
  %1954 = vmatprep.subr.bf16.mxu0 0
  %1955 = vmatpush1.bf16.msra.mxu0 %v1934
  %1956 = vmatprep.subr.bf16.mxu0 0
  %1957 = vmatpush1.bf16.msra.mxu0 %v1935
  %1958 = vmatprep.subr.bf16.mxu0 0
  %1959 = vmatpush1.bf16.msra.mxu0 %v1936
  %1960 = vmatprep.subr.bf16.mxu0 0
  %1961 = vmatpush1.bf16.msra.mxu0 %v1937
  %1962 = vmatprep.subr.bf16.mxu0 0
  %1963 = vmatpush1.bf16.msra.mxu0 0
  %1964 = vmatprep.subr.bf16.mxu0 0
  %1965 = vmatpush1.bf16.msra.mxu0 0
  %1966 = vmatprep.subr.bf16.mxu0 0
  %1967 = vmatpush1.bf16.msra.mxu0 0
  %1968 = vmatprep.subr.bf16.mxu0 0
  %1969 = vmatpush1.bf16.msra.mxu0 0
  %1970 = vmatprep.subr.bf16.mxu0 0
  %1971 = vmatpush1.bf16.msra.mxu0 0
  %1972 = vmatprep.subr.bf16.mxu0 0
  %1973 = vmatpush1.bf16.msra.mxu0 0
  %1974 = vmatprep.subr.bf16.mxu0 0
  %1975 = vmatpush1.bf16.msra.mxu0 0
  %1976 = vmatprep.subr.bf16.mxu0 0
  %1977 = vmatpush1.bf16.msra.mxu0 0
  %1978 = vmatprep.mubr.bf16.mxu0 0
  %1979 = vmatmul.mubr.bf16.gmra.mrb[0].mxu0 %v1823
  %v1980 = vpop.f32.mrb[0].mxu0
  %v1981 = vadd.f32 0.0, %v1980
  %v1982 = vpop.f32.mrb[0].mxu0
  %v1983 = vpop.f32.mrb[0].mxu0
  %v1984 = vpop.f32.mrb[0].mxu0
  %1985 = vdwg.mxu0
  %v2002 = vunpack.c.l.b16 %v1866
  %v2003 = vunpack.c.l.b16 %v1867
  %v2004 = vunpack.c.l.b16 %v1868
  %v2005 = vunpack.c.l.b16 %v1869
  %v2006 = vunpack.c.l.b16 %v1870
  %v2007 = vunpack.c.l.b16 %v1871
  %v2008 = vunpack.c.l.b16 %v1872
  %v2009 = vunpack.c.l.b16 %v1873
  %v2010 = vunpack.c.l.b16 %v1874
  %v2011 = vunpack.c.l.b16 %v1875
  %v2012 = vunpack.c.l.b16 %v1876
  %v2013 = vunpack.c.l.b16 %v1877
  %v2014 = vunpack.c.l.b16 %v1878
  %v2015 = vunpack.c.l.b16 %v1879
  %v2016 = vunpack.c.l.b16 %v1880
  %v2017 = vunpack.c.l.b16 %v1881
  %v2018 = vpack.c.b16 %v2003, %v2002
  %v2019 = vpack.c.b16 %v2005, %v2004
  %v2020 = vpack.c.b16 %v2007, %v2006
  %v2021 = vpack.c.b16 %v2009, %v2008
  %v2022 = vpack.c.b16 %v2011, %v2010
  %v2023 = vpack.c.b16 %v2013, %v2012
  %v2024 = vpack.c.b16 %v2015, %v2014
  %v2025 = vpack.c.b16 %v2017, %v2016
  %2034 = vmatprep.subr.bf16.mxu0 0
  %2035 = vmatpush1.bf16.msra.mxu0 %v2018
  %2036 = vmatprep.subr.bf16.mxu0 0
  %2037 = vmatpush1.bf16.msra.mxu0 %v2019
  %2038 = vmatprep.subr.bf16.mxu0 0
  %2039 = vmatpush1.bf16.msra.mxu0 %v2020
  %2040 = vmatprep.subr.bf16.mxu0 0
  %2041 = vmatpush1.bf16.msra.mxu0 %v2021
  %2042 = vmatprep.subr.bf16.mxu0 0
  %2043 = vmatpush1.bf16.msra.mxu0 %v2022
  %2044 = vmatprep.subr.bf16.mxu0 0
  %2045 = vmatpush1.bf16.msra.mxu0 %v2023
  %2046 = vmatprep.subr.bf16.mxu0 0
  %2047 = vmatpush1.bf16.msra.mxu0 %v2024
  %2048 = vmatprep.subr.bf16.mxu0 0
  %2049 = vmatpush1.bf16.msra.mxu0 %v2025
  %2050 = vmatprep.subr.bf16.mxu0 0
  %2051 = vmatpush1.bf16.msra.mxu0 0
  %2052 = vmatprep.subr.bf16.mxu0 0
  %2053 = vmatpush1.bf16.msra.mxu0 0
  %2054 = vmatprep.subr.bf16.mxu0 0
  %2055 = vmatpush1.bf16.msra.mxu0 0
  %2056 = vmatprep.subr.bf16.mxu0 0
  %2057 = vmatpush1.bf16.msra.mxu0 0
  %2058 = vmatprep.subr.bf16.mxu0 0
  %2059 = vmatpush1.bf16.msra.mxu0 0
  %2060 = vmatprep.subr.bf16.mxu0 0
  %2061 = vmatpush1.bf16.msra.mxu0 0
  %2062 = vmatprep.subr.bf16.mxu0 0
  %2063 = vmatpush1.bf16.msra.mxu0 0
  %2064 = vmatprep.subr.bf16.mxu0 0
  %2065 = vmatpush1.bf16.msra.mxu0 0
  %2066 = vmatprep.mubr.bf16.mxu0 0
  %2067 = vmatmul.mubr.bf16.gmra.mrb[0].mxu0 %v1781
  %v2068 = vpop.f32.mrb[0].mxu0
  %v2069 = vadd.f32 %v1981, %v2068
  %v2070 = vpop.f32.mrb[0].mxu0
  %v2071 = vpop.f32.mrb[0].mxu0
  %v2072 = vpop.f32.mrb[0].mxu0
  %2073 = vdwg.mxu0
  %v2074 = vld [vmem:[%s18] sm:$0xf]
  %v2075 = vld [vmem:[%s18 + $0x4] sm:$0xf]
  %v2076 = vld [vmem:[%s18 + $0x8] sm:$0xf]
  %v2077 = vld [vmem:[%s18 + $0xc] sm:$0xf]
  %v2078 = vld [vmem:[%s18 + $0x10] sm:$0xf]
  %v2079 = vld [vmem:[%s18 + $0x14] sm:$0xf]
  %v2080 = vld [vmem:[%s18 + $0x18] sm:$0xf]
  %v2081 = vld [vmem:[%s18 + $0x1c] sm:$0xf]
  %v2082 = vld [vmem:[%s18 + $0x20] sm:$0xf]
  %v2083 = vld [vmem:[%s18 + $0x24] sm:$0xf]
  %v2084 = vld [vmem:[%s18 + $0x28] sm:$0xf]
  %v2085 = vld [vmem:[%s18 + $0x2c] sm:$0xf]
  %v2086 = vld [vmem:[%s18 + $0x30] sm:$0xf]
  %v2087 = vld [vmem:[%s18 + $0x34] sm:$0xf]
  %v2088 = vld [vmem:[%s18 + $0x38] sm:$0xf]
  %v2089 = vld [vmem:[%s18 + $0x3c] sm:$0xf]
  %v2106 = vunpack.c.l.b16 %v2074
  %v2107 = vunpack.c.l.b16 %v2075
  %v2108 = vunpack.c.l.b16 %v2076
  %v2109 = vunpack.c.l.b16 %v2077
  %v2110 = vunpack.c.l.b16 %v2078
  %v2111 = vunpack.c.l.b16 %v2079
  %v2112 = vunpack.c.l.b16 %v2080
  %v2113 = vunpack.c.l.b16 %v2081
  %v2114 = vunpack.c.l.b16 %v2082
  %v2115 = vunpack.c.l.b16 %v2083
  %v2116 = vunpack.c.l.b16 %v2084
  %v2117 = vunpack.c.l.b16 %v2085
  %v2118 = vunpack.c.l.b16 %v2086
  %v2119 = vunpack.c.l.b16 %v2087
  %v2120 = vunpack.c.l.b16 %v2088
  %v2121 = vunpack.c.l.b16 %v2089
  %v2122 = vpack.c.b16 %v2107, %v2106
  %v2123 = vpack.c.b16 %v2109, %v2108
  %v2124 = vpack.c.b16 %v2111, %v2110
  %v2125 = vpack.c.b16 %v2113, %v2112
  %v2126 = vpack.c.b16 %v2115, %v2114
  %v2127 = vpack.c.b16 %v2117, %v2116
  %v2128 = vpack.c.b16 %v2119, %v2118
  %v2129 = vpack.c.b16 %v2121, %v2120
  %2138 = vmatprep.subr.bf16.mxu0 0
  %2139 = vmatpush1.bf16.msra.mxu0 %v2122
  %2140 = vmatprep.subr.bf16.mxu0 0
  %2141 = vmatpush1.bf16.msra.mxu0 %v2123
  %2142 = vmatprep.subr.bf16.mxu0 0
  %2143 = vmatpush1.bf16.msra.mxu0 %v2124
  %2144 = vmatprep.subr.bf16.mxu0 0
  %2145 = vmatpush1.bf16.msra.mxu0 %v2125
  %2146 = vmatprep.subr.bf16.mxu0 0
  %2147 = vmatpush1.bf16.msra.mxu0 %v2126
  %2148 = vmatprep.subr.bf16.mxu0 0
  %2149 = vmatpush1.bf16.msra.mxu0 %v2127
  %2150 = vmatprep.subr.bf16.mxu0 0
  %2151 = vmatpush1.bf16.msra.mxu0 %v2128
  %2152 = vmatprep.subr.bf16.mxu0 0
  %2153 = vmatpush1.bf16.msra.mxu0 %v2129
  %2154 = vmatprep.subr.bf16.mxu0 0
  %2155 = vmatpush1.bf16.msra.mxu0 0
  %2156 = vmatprep.subr.bf16.mxu0 0
  %2157 = vmatpush1.bf16.msra.mxu0 0
  %2158 = vmatprep.subr.bf16.mxu0 0
  %2159 = vmatpush1.bf16.msra.mxu0 0
  %2160 = vmatprep.subr.bf16.mxu0 0
  %2161 = vmatpush1.bf16.msra.mxu0 0
  %2162 = vmatprep.subr.bf16.mxu0 0
  %2163 = vmatpush1.bf16.msra.mxu0 0
  %2164 = vmatprep.subr.bf16.mxu0 0
  %2165 = vmatpush1.bf16.msra.mxu0 0
  %2166 = vmatprep.subr.bf16.mxu0 0
  %2167 = vmatpush1.bf16.msra.mxu0 0
  %2168 = vmatprep.subr.bf16.mxu0 0
  %2169 = vmatpush1.bf16.msra.mxu0 0
  %2170 = vmatprep.mubr.bf16.mxu0 0
  %2171 = vmatmul.mubr.bf16.gmra.mrb[0].mxu0 %v1865
  %v2172 = vpop.f32.mrb[0].mxu0
  %v2173 = vadd.f32 0.0, %v2172
  %v2174 = vpop.f32.mrb[0].mxu0
  %v2175 = vpop.f32.mrb[0].mxu0
  %v2176 = vpop.f32.mrb[0].mxu0
  %2177 = vdwg.mxu0
  %v2178 = vadd.f32 %v2069, %v2173
  %v2179 = vld [vmem:[%s19] sm:$0x1]
  %v2181 = vlaneseq
  %v2182 = vshrl.u32 %v2181, 7
  %v2183 = vsub.s32 0, %v2182
  %v2184 = vrot.slane %v2179, %v2183
  %v2186 = vadd.f32 %v2178, %v2184
  %v2187 = vmax.f32 %v2186, 0.0
  %v2188 = vpack.c.bf16 %v2187, %v2187
  %v2189 = vld [vmem:[%s20] sm:$0xf]
  %v2190 = vld [vmem:[%s20 + $0x4] sm:$0xf]
  %v2191 = vld [vmem:[%s20 + $0x8] sm:$0xf]
  %v2192 = vld [vmem:[%s20 + $0xc] sm:$0xf]
  %v2193 = vld [vmem:[%s20 + $0x10] sm:$0xf]
  %v2194 = vld [vmem:[%s20 + $0x14] sm:$0xf]
  %v2195 = vld [vmem:[%s20 + $0x18] sm:$0xf]
  %v2196 = vld [vmem:[%s20 + $0x1c] sm:$0xf]
  %v2197 = vld [vmem:[%s20 + $0x20] sm:$0xf]
  %v2198 = vld [vmem:[%s20 + $0x24] sm:$0xf]
  %v2199 = vld [vmem:[%s20 + $0x28] sm:$0xf]
  %v2200 = vld [vmem:[%s20 + $0x2c] sm:$0xf]
  %v2201 = vld [vmem:[%s20 + $0x30] sm:$0xf]
  %v2202 = vld [vmem:[%s20 + $0x34] sm:$0xf]
  %v2203 = vld [vmem:[%s20 + $0x38] sm:$0xf]
  %v2204 = vld [vmem:[%s20 + $0x3c] sm:$0xf]
  %v2205 = vld [vmem:[%s21] sm:$0x1]
  %v2207 = vlaneseq
  %v2208 = vshrl.u32 %v2207, 7
  %v2209 = vsub.s32 0, %v2208
  %v2210 = vrot.slane %v2205, %v2209
  %v2228 = vunpack.c.l.b16 %v2189
  %v2229 = vunpack.c.l.b16 %v2190
  %v2230 = vunpack.c.l.b16 %v2191
  %v2231 = vunpack.c.l.b16 %v2192
  %v2232 = vunpack.c.l.b16 %v2193
  %v2233 = vunpack.c.l.b16 %v2194
  %v2234 = vunpack.c.l.b16 %v2195
  %v2235 = vunpack.c.l.b16 %v2196
  %v2236 = vunpack.c.l.b16 %v2197
  %v2237 = vunpack.c.l.b16 %v2198
  %v2238 = vunpack.c.l.b16 %v2199
  %v2239 = vunpack.c.l.b16 %v2200
  %v2240 = vunpack.c.l.b16 %v2201
  %v2241 = vunpack.c.l.b16 %v2202
  %v2242 = vunpack.c.l.b16 %v2203
  %v2243 = vunpack.c.l.b16 %v2204
  %v2244 = vpack.c.b16 %v2229, %v2228
  %v2245 = vpack.c.b16 %v2231, %v2230
  %v2246 = vpack.c.b16 %v2233, %v2232
  %v2247 = vpack.c.b16 %v2235, %v2234
  %v2248 = vpack.c.b16 %v2237, %v2236
  %v2249 = vpack.c.b16 %v2239, %v2238
  %v2250 = vpack.c.b16 %v2241, %v2240
  %v2251 = vpack.c.b16 %v2243, %v2242
  %2260 = vmatprep.subr.bf16.mxu0 0
  %2261 = vmatpush1.bf16.msra.mxu0 %v2244
  %2262 = vmatprep.subr.bf16.mxu0 0
  %2263 = vmatpush1.bf16.msra.mxu0 %v2245
  %2264 = vmatprep.subr.bf16.mxu0 0
  %2265 = vmatpush1.bf16.msra.mxu0 %v2246
  %2266 = vmatprep.subr.bf16.mxu0 0
  %2267 = vmatpush1.bf16.msra.mxu0 %v2247
  %2268 = vmatprep.subr.bf16.mxu0 0
  %2269 = vmatpush1.bf16.msra.mxu0 %v2248
  %2270 = vmatprep.subr.bf16.mxu0 0
  %2271 = vmatpush1.bf16.msra.mxu0 %v2249
  %2272 = vmatprep.subr.bf16.mxu0 0
  %2273 = vmatpush1.bf16.msra.mxu0 %v2250
  %2274 = vmatprep.subr.bf16.mxu0 0
  %2275 = vmatpush1.bf16.msra.mxu0 %v2251
  %2276 = vmatprep.subr.bf16.mxu0 0
  %2277 = vmatpush1.bf16.msra.mxu0 0
  %2278 = vmatprep.subr.bf16.mxu0 0
  %2279 = vmatpush1.bf16.msra.mxu0 0
  %2280 = vmatprep.subr.bf16.mxu0 0
  %2281 = vmatpush1.bf16.msra.mxu0 0
  %2282 = vmatprep.subr.bf16.mxu0 0
  %2283 = vmatpush1.bf16.msra.mxu0 0
  %2284 = vmatprep.subr.bf16.mxu0 0
  %2285 = vmatpush1.bf16.msra.mxu0 0
  %2286 = vmatprep.subr.bf16.mxu0 0
  %2287 = vmatpush1.bf16.msra.mxu0 0
  %2288 = vmatprep.subr.bf16.mxu0 0
  %2289 = vmatpush1.bf16.msra.mxu0 0
  %2290 = vmatprep.subr.bf16.mxu0 0
  %2291 = vmatpush1.bf16.msra.mxu0 0
  %2292 = vmatprep.mubr.bf16.mxu0 0
  %2293 = vmatmul.mubr.bf16.gmra.mrb[0].mxu0 %v2188
  %v2294 = vpop.f32.mrb[0].mxu0
  %v2295 = vadd.f32 %v2210, %v2294
  %v2296 = vpop.f32.mrb[0].mxu0
  %v2297 = vpop.f32.mrb[0].mxu0
  %v2298 = vpop.f32.mrb[0].mxu0
  %2299 = vdwg.mxu0
  %2300 = vst [vmem:[%s22] sm:$0xff] %v2295
  %v2301 = vlaneseq
  %v2302 = vand.u32 %v2301, 127
  %vm2303 = vcmp.lt.s32.totalorder %v2302, 8
  %v2304 = vsel %vm2303, %v2295, -1e+30
  %2305 = vmax.xlane.f32.xlu0 %v2304
  %v2306 = vpop.xlane.xlu0 %2305
  %v2307 = vsub.f32 %v2304, %v2306
  %v2308 = vmul.f32 %v2307, 1.442695
  %v2309 = vpow.pop %v2308
  %2310 = vadd.xlane.f32.xlu0 %v2309
  %v2311 = vpop.xlane.xlu0 %2310
  %v2312 = vlog2.pop %v2311
  %v2313 = vmul.f32 %v2312, 0.6931472
  %v2314 = vsub.f32 %v2307, %v2313
  %2315 = vst [vmem:[%s23] sm:$0xff] %v2314
  // Predicated region
  $region90: #{fixed_gin_forward.1} parent=0 // pred_check
    _
  $region91: #{fixed_gin_forward.1} parent=0 // pred_check_branch
    %2317 = sbr.rel (0) target = $region93
  $region92: #{fixed_gin_forward.1} parent=0 // pred_region
    _
  $region93: #{fixed_gin_forward.1} parent=0 // pred_fallthru
    _
  // Predicated region
  $region94: #{fixed_gin_forward.1} parent=0 // pred_check
    _
  $region95: #{fixed_gin_forward.1} parent=0 // pred_check_branch
    %2319 = sbr.rel (0) target = $region97
  $region96: #{fixed_gin_forward.1} parent=0 // pred_region
    _
  $region97: #{fixed_gin_forward.1} parent=0 // pred_fallthru
    _
  // Predicated region
  $region98: #{fixed_gin_forward.1} parent=0 // pred_check
    _
  $region99: #{fixed_gin_forward.1} parent=0 // pred_check_branch
    %2321 = sbr.rel (0) target = $region101
  $region100: #{fixed_gin_forward.1} parent=0 // pred_region
    _
  $region101: #{fixed_gin_forward.1} parent=0 // pred_fallthru
    _
  // Predicated region
  $region102: #{fixed_gin_forward.1} parent=0 // pred_check
    _
  $region103: #{fixed_gin_forward.1} parent=0 // pred_check_branch
    %2323 = sbr.rel (0) target = $region105
  $region104: #{fixed_gin_forward.1} parent=0 // pred_region
    _
  $region105: #{fixed_gin_forward.1} parent=0 // pred_fallthru
    _

</llo_original>
